<compile_context>
chip_gen: v5e
topology: v5e:2x2
jax: 0.10.0
libtpu: 0.0.40
codegen_flags: <defaults>
</compile_context>

<pallas_src>
import functools

import jax
import jax.numpy as jnp
from jax.experimental import pallas as pl
from jax.experimental.pallas import tpu as pltpu

N_ROI = 12       # module asserts N == 12
N_PAD = 16       # ROIs padded to a sublane-aligned row block
D_IMG = 512      # conv in-channels hard-coded to 512 in the module
LN_EPS = 1e-5    # nn.LayerNorm default


def _round_up(x, m):
    return (x + m - 1) // m * m


# ----------------------------- fused all-layer kernel ------------------------------
def cet_kernel(roi_ref, img_ref, convw_ref, embw0_ref, embwR_ref, vecs_ref,
               w1_ref, w2_ref, lnblk_ref, out_ref, ctx_scr, emb_scr,
               *, num_layers, num_heads, nfc):
    TB = img_ref.shape[0]
    lnblk = lnblk_ref[...]                        # (HCp, HCp) per-head mean matrix

    def block_ln(x, g, b):
        # per-head LayerNorm over each head's NFC lanes via the block mean matrix
        mu = jnp.dot(x, lnblk, preferred_element_type=jnp.float32)
        xc = x - mu
        var = jnp.dot(xc * xc, lnblk, preferred_element_type=jnp.float32)
        return xc * jax.lax.rsqrt(var + LN_EPS) * g + b

    # Padded lanes (HC..HCp) are never written by the attention loop; zero them once so
    # they stay exactly 0 through LN/FFN (the weight/LN padding is zero as well).
    ctx_scr[...] = jnp.zeros_like(ctx_scr)

    x = roi_ref[...]                              # (TB*N_PAD, NFB) layer-1 roi input

    for l in range(num_layers):                   # static; image block reused by all layers
        vec = vecs_ref[l]                         # (8, HCp) packed per-layer vectors
        convb, embb = vec[0:1], vec[1:2]
        ln1g, ln1b = vec[2:3], vec[3:4]
        b1, b2 = vec[4:5], vec[5:6]
        ln2g, ln2b = vec[6:7], vec[7:8]
        convw_l = convw_ref[l]                    # (512, HCp) bf16, heads stacked on lanes
        embw = embw0_ref[...] if l == 0 else embwR_ref[l - 1]

        # hoisted: roi embedding for the whole (TB*N_PAD) block (all heads fused)
        emb = jnp.dot(x, embw, preferred_element_type=jnp.float32) + embb
        emb_scr[...] = emb

        def batch_body(b, carry):
            row0 = pl.multiple_of(b * N_PAD, 8)
            # 1x1 conv, all heads fused (bf16 x bf16 -> f32 on the MXU, M = P)
            img_b = jnp.dot(img_ref[b], convw_l,
                            preferred_element_type=jnp.float32) + convb       # (P, HCp)
            emb_b = emb_scr[pl.ds(row0, N_PAD), :]                             # (N_PAD, HCp)
            for h in range(num_heads):
                lo = h * nfc
                img_h = img_b[:, lo:lo + nfc]
                emb_h = emb_b[:, lo:lo + nfc]
                # attention logits: contract channel dims directly (no transpose)
                a = jax.lax.dot_general(
                    emb_h, img_h, dimension_numbers=(((1,), (1,)), ((), ())),
                    preferred_element_type=jnp.float32)                        # (N_PAD, P)
                a = a - jnp.max(a, axis=-1, keepdims=True)
                e = jnp.exp(a)
                att = e * pl.reciprocal(jnp.sum(e, axis=-1, keepdims=True), approx=True)
                ctx_scr[pl.ds(row0, N_PAD), lo:lo + nfc] = jnp.dot(
                    att, img_h, preferred_element_type=jnp.float32)
            return carry

        jax.lax.fori_loop(0, TB, batch_body, 0, unroll=True)

        # TODO(synk): dropout is identity (eval mode); training-mode dropout not implemented.
        y = block_ln(ctx_scr[...] + emb, ln1g, ln1b)
        hid = jnp.maximum(jnp.dot(y, w1_ref[l], preferred_element_type=jnp.float32) + b1, 0.0)
        y = y + jnp.dot(hid, w2_ref[l], preferred_element_type=jnp.float32) + b2
        x = block_ln(y, ln2g, ln2b)               # feeds next layer's emb_roi

    out_ref[...] = x


# ----------------------------- wrapper ------------------------------
def _choose_tb(BT, P):
    """Batch-block size: largest divisor of BT whose double-buffered bf16 image block
    fits a conservative VMEM budget, capped at 8.  Keep >=2 grid steps when BT allows so
    the 'parallel' grid axis can feed both v7x TensorCores (costs only ~0.35us/step on
    single-core v5e/v6e)."""
    budget = 16 * 1024 * 1024
    per_bt = 2 * P * D_IMG * 2                   # double-buffered bf16 image per batch elem
    cap = max(1, min(8, budget // max(per_bt, 1), BT))
    if BT >= 2:
        cap = max(1, min(cap, BT // 2))
    tb = cap
    while BT % tb:
        tb -= 1
    return tb


def stack_params(all_params, num_layers, num_heads, nfc, hcp):
    """Stack per-head / per-layer parameters into fused, lane-dense (zero-padded) arrays."""
    H = num_heads
    f32 = jnp.float32

    def padc(x):                                  # zero-pad last dim to hcp
        return jnp.pad(x, [(0, 0)] * (x.ndim - 1) + [(0, hcp - x.shape[-1])])

    def pad2(x):                                  # zero-pad both dims to (hcp, hcp)
        return jnp.pad(x, [(0, hcp - x.shape[0]), (0, hcp - x.shape[1])])

    convw, vecs, w1, w2, embw_rest = [], [], [], [], []
    embw0 = None
    for i in range(num_layers):
        hp = all_params[i * H:(i + 1) * H]
        convw.append(padc(jnp.concatenate([p["convw"] for p in hp], axis=1)))

        def cat(name):
            return padc(jnp.concatenate([p[name].reshape(1, nfc) for p in hp], axis=1))

        vecs.append(jnp.concatenate(
            [cat(n) for n in ("convb", "embb", "ln1g", "ln1b", "b1", "b2", "ln2g", "ln2b")],
            axis=0))
        w1.append(pad2(jax.scipy.linalg.block_diag(*[p["w1"] for p in hp])))
        w2.append(pad2(jax.scipy.linalg.block_diag(*[p["w2"] for p in hp])))
        emb_cat = jnp.concatenate([p["embw"] for p in hp], axis=1)
        if i == 0:
            embw0 = padc(emb_cat)                 # (NFB, hcp)
        else:
            embw_rest.append(pad2(emb_cat))       # (hcp, hcp)
    if not embw_rest:                             # num_layers == 1: dummy, never read
        embw_rest.append(jnp.zeros((hcp, hcp), f32))

    lnblk = pad2(jnp.kron(jnp.eye(H, dtype=f32),
                          jnp.full((nfc, nfc), 1.0 / nfc, f32)))
    return dict(
        convw=jnp.stack(convw).astype(jnp.bfloat16),   # (L, 512, hcp)
        embw0=embw0.astype(f32),                       # (NFB, hcp)
        embwR=jnp.stack(embw_rest).astype(f32),        # (max(L-1,1), hcp, hcp)
        vecs=jnp.stack(vecs).astype(f32),              # (L, 8, hcp)
        w1=jnp.stack(w1).astype(f32),                  # (L, hcp, hcp)
        w2=jnp.stack(w2).astype(f32),                  # (L, hcp, hcp)
        lnblk=lnblk.astype(f32),                       # (hcp, hcp)
    )


def cet_forward(roi_p, img, params, num_layers, num_heads, nfc, hcp, tb):
    """All layers and heads in a single pallas_call.

    roi_p: (BT*N_PAD, NFB) f32 (N padded 12->16)
    img:   (BT, P, 512)    bf16
    returns (BT*N_PAD, hcp) f32
    """
    BT, P, _ = img.shape
    nfb = roi_p.shape[-1]
    L = num_layers
    LR = params["embwR"].shape[0]

    kern = functools.partial(cet_kernel, num_layers=num_layers,
                             num_heads=num_heads, nfc=nfc)
    fixed = lambda shape: pl.BlockSpec(shape, lambda b: (0,) * len(shape))

    return pl.pallas_call(
        kern,
        out_shape=jax.ShapeDtypeStruct((BT * N_PAD, hcp), jnp.float32),
        grid=(BT // tb,),
        in_specs=[
            pl.BlockSpec((tb * N_PAD, nfb), lambda b: (b, 0)),     # roi (layer-1 input)
            pl.BlockSpec((tb, P, D_IMG), lambda b: (b, 0, 0)),     # image, bf16
            fixed((L, D_IMG, hcp)),                                # fused 1x1-conv weights
            fixed((nfb, hcp)),                                     # layer-1 emb_roi weight
            fixed((LR, hcp, hcp)),                                 # layer>1 emb_roi weights
            fixed((L, 8, hcp)),                                    # packed bias / LN vectors
            fixed((L, hcp, hcp)),                                  # block-diag FFN W1
            fixed((L, hcp, hcp)),                                  # block-diag FFN W2
            fixed((hcp, hcp)),                                     # LayerNorm mean matrix
        ],
        out_specs=pl.BlockSpec((tb * N_PAD, hcp), lambda b: (b, 0)),
        scratch_shapes=[pltpu.VMEM((tb * N_PAD, hcp), jnp.float32),   # ctx (per-head writes)
                        pltpu.VMEM((tb * N_PAD, hcp), jnp.float32)],  # emb (per-batch reads)
        compiler_params=pltpu.CompilerParams(
            dimension_semantics=("parallel",),
            vmem_limit_bytes=48 * 1024 * 1024),
    )(roi_p, img, params["convw"], params["embw0"], params["embwR"],
      params["vecs"], params["w1"], params["w2"], params["lnblk"])


def multi_head_forward(roi_feature, image_feature, all_params, num_layers, num_heads):
    """MultiHeadLayerEmbfeatureContextEncoding.forward.

    roi_feature:   (BT*N, NFB)
    image_feature: (BT, 512, OH, OW)  (NCHW, like PyTorch)
    """
    BT, D, OH, OW = image_feature.shape
    assert D == D_IMG
    P = OH * OW
    nfb = roi_feature.shape[-1]
    nfc = all_params[0]["convw"].shape[1]
    HC = num_heads * nfc
    hcp = _round_up(HC, 128)

    # NCHW -> (BT, OH*OW, 512), pixel index = oh*OW + ow (matches PyTorch reshape order);
    # bf16 halves the dominant HBM stream and feeds the bf16-native MXU.
    img = jnp.transpose(image_feature, (0, 2, 3, 1)).reshape(BT, P, D_IMG).astype(jnp.bfloat16)

    # pad N=12 -> 16 for sublane alignment; fake rows are row-independent and dropped below
    roi3 = roi_feature.reshape(BT, N_ROI, nfb)
    roi_p = jnp.pad(roi3, ((0, 0), (0, N_PAD - N_ROI), (0, 0))).reshape(BT * N_PAD, nfb)

    params = stack_params(all_params, num_layers, num_heads, nfc, hcp)
    tb = _choose_tb(BT, P)

    out = cet_forward(roi_p, img, params, num_layers, num_heads, nfc, hcp, tb)
    return out.reshape(BT, N_PAD, hcp)[:, :N_ROI, :HC].reshape(BT * N_ROI, HC)


# ---------------- pure-JAX reference (mirrors the PyTorch math, eval mode) ----------------
# Note: the reference uses the same bf16 image / conv-weight operands as the kernel (the
# deliberate mixed-precision policy); everything else is f32.
def _layernorm(x, g, b):
    mu = jnp.mean(x, axis=-1, keepdims=True)
    var = jnp.mean((x - mu) * (x - mu), axis=-1, keepdims=True)
    return (x - mu) * jax.lax.rsqrt(var + LN_EPS) * g + b


def _ref_head(roi, img_bf16, p):
    BT, P, _ = img_bf16.shape
    nfc = p["convw"].shape[1]
    img = jnp.dot(img_bf16, p["convw"].astype(jnp.bfloat16),
                  preferred_element_type=jnp.float32) + p["convb"]    # (BT, P, NFC)
    emb = roi @ p["embw"] + p["embb"]                                 # (BT*N, NFC)
    emb3 = emb.reshape(BT, N_ROI, nfc)
    a = jnp.einsum("bnc,bpc->bnp", emb3, img)
    A = jax.nn.softmax(a, axis=2)
    ctx = jnp.einsum("bnp,bpc->bnc", A, img).reshape(BT * N_ROI, nfc)
    x = _layernorm(ctx + emb, p["ln1g"], p["ln1b"])
    h = jnp.maximum(x @ p["w1"] + p["b1"], 0.0)
    y = x + (h @ p["w2"] + p["b2"])
    return _layernorm(y, p["ln2g"], p["ln2b"])


def _ref_forward(roi, image_feature, all_params, num_layers, num_heads):
    BT, D, OH, OW = image_feature.shape
    img = jnp.transpose(image_feature, (0, 2, 3, 1)).reshape(BT, OH * OW, D)
    img = img.astype(jnp.bfloat16)
    for i in range(num_layers):
        outs = [_ref_head(roi, img, all_params[i * num_heads + j])
                for j in range(num_heads)]
        roi = jnp.concatenate(outs, axis=1)
    return roi


# ---------------- deterministic parameter init ----------------
def init_head_params(key, layer_id, NFC, NFB, num_heads):
    din = NFB if layer_id == 1 else NFC * num_heads
    ks = jax.random.split(key, 8)
    f32 = jnp.float32
    return {
        "convw": 0.02 * jax.random.normal(ks[0], (D_IMG, NFC), f32),
        "convb": 0.02 * jax.random.normal(ks[1], (1, NFC), f32),
        "embw": 0.05 * jax.random.normal(ks[2], (din, NFC), f32),
        "embb": 0.05 * jax.random.normal(ks[3], (1, NFC), f32),
        "ln1g": jnp.ones((1, NFC), f32),
        "ln1b": jnp.zeros((1, NFC), f32),
        "w1": 0.05 * jax.random.normal(ks[4], (NFC, NFC), f32),
        "b1": 0.05 * jax.random.normal(ks[5], (1, NFC), f32),
        "w2": 0.05 * jax.random.normal(ks[6], (NFC, NFC), f32),
        "b2": 0.05 * jax.random.normal(ks[7], (1, NFC), f32),
        "ln2g": jnp.ones((1, NFC), f32),
        "ln2b": jnp.zeros((1, NFC), f32),
    }


if __name__ == "__main__":
    # Small but forward-consistent shapes:
    #   N = 12 (module asserts), conv in-channels = 512 (hard-coded in module)
    num_layers = 2
    num_heads = 2
    NFC = 32          # num_features_context
    NFB = 48          # roi feature dim at layer 1
    BT = 2            # B*T
    OH, OW = 8, 8

    root = jax.random.PRNGKey(0)
    k_roi, k_img, k_par = jax.random.split(root, 3)

    roi_feature = jax.random.normal(k_roi, (BT * N_ROI, NFB), jnp.float32)
    image_feature = jax.random.normal(k_img, (BT, D_IMG, OH, OW), jnp.float32)

    param_keys = jax.random.split(k_par, num_layers * num_heads)
    all_params = []
    for i in range(num_layers):
        for j in range(num_heads):
            all_params.append(
                init_head_params(param_keys[i * num_heads + j], i + 1, NFC, NFB, num_heads))

    fwd = functools.partial(multi_head_forward,
                            num_layers=num_layers, num_heads=num_heads)
    out = fwd(roi_feature, image_feature, all_params)
    out = jax.block_until_ready(out)

    ref = _ref_forward(roi_feature, image_feature, all_params, num_layers, num_heads)
    ref = jax.block_until_ready(ref)

    assert out.shape == (BT * N_ROI, NFC * num_heads), out.shape
    max_err = float(jnp.max(jnp.abs(out - ref)))
    assert max_err < 2e-2, f"mismatch vs reference: {max_err}"

    print("KERNEL_OK")
</pallas_src>

<mosaic_0001>
module attributes {stable_mosaic.version = 11 : i64} {
  func.func @cet_kernel(%arg0: i32, %arg1: memref<16x48xf32, #tpu.memory_space<vmem>>, %arg2: memref<1x64x512xbf16, #tpu.memory_space<vmem>>, %arg3: memref<2x512x128xbf16, #tpu.memory_space<vmem>>, %arg4: memref<48x128xf32, #tpu.memory_space<vmem>>, %arg5: memref<1x128x128xf32, #tpu.memory_space<vmem>>, %arg6: memref<2x8x128xf32, #tpu.memory_space<vmem>>, %arg7: memref<2x128x128xf32, #tpu.memory_space<vmem>>, %arg8: memref<2x128x128xf32, #tpu.memory_space<vmem>>, %arg9: memref<128x128xf32, #tpu.memory_space<vmem>>, %arg10: memref<16x128xf32, #tpu.memory_space<vmem>>, %arg11: memref<16x128xf32, #tpu.memory_space<vmem>>, %arg12: memref<16x128xf32, #tpu.memory_space<vmem>>) attributes {dimension_semantics = [#tpu.dimension_semantics<parallel>], iteration_bounds = array<i64: 2>, scalar_prefetch = 0 : i64, scratch_operands = 2 : i64, tpu.core_type = #tpu.core_type<tc>, window_params = [{transform_indices = @transform_0, window_bounds = array<i64: 16, 48>}, {transform_indices = @transform_1, window_bounds = array<i64: 1, 64, 512>}, {pipeline_mode = #tpu.pipeline_mode<synchronous>, transform_indices = @transform_2, window_bounds = array<i64: 2, 512, 128>}, {pipeline_mode = #tpu.pipeline_mode<synchronous>, transform_indices = @transform_3, window_bounds = array<i64: 48, 128>}, {pipeline_mode = #tpu.pipeline_mode<synchronous>, transform_indices = @transform_4, window_bounds = array<i64: 1, 128, 128>}, {pipeline_mode = #tpu.pipeline_mode<synchronous>, transform_indices = @transform_5, window_bounds = array<i64: 2, 8, 128>}, {pipeline_mode = #tpu.pipeline_mode<synchronous>, transform_indices = @transform_6, window_bounds = array<i64: 2, 128, 128>}, {pipeline_mode = #tpu.pipeline_mode<synchronous>, transform_indices = @transform_7, window_bounds = array<i64: 2, 128, 128>}, {pipeline_mode = #tpu.pipeline_mode<synchronous>, transform_indices = @transform_8, window_bounds = array<i64: 128, 128>}, {transform_indices = @transform_9, window_bounds = array<i64: 16, 128>}]} {
    %c0 = arith.constant 0 : index
    %c0_0 = arith.constant 0 : index
    %0 = vector.load %arg9[%c0, %c0_0] : memref<128x128xf32, #tpu.memory_space<vmem>>, vector<128x128xf32>
    %cst = arith.constant 0.000000e+00 : f32
    %1 = vector.broadcast %cst : f32 to vector<16x128xf32>
    %c0_1 = arith.constant 0 : index
    %c0_2 = arith.constant 0 : index
    %2 = vector.load %arg11[%c0_1, %c0_2] : memref<16x128xf32, #tpu.memory_space<vmem>>, vector<16x128xf32>
    tpu.vector_store %arg11[%c0_1, %c0_2], %1 {strides = array<i32>} : memref<16x128xf32, #tpu.memory_space<vmem>>, vector<16x128xf32>,
    %c0_3 = arith.constant 0 : index
    %c0_4 = arith.constant 0 : index
    %3 = vector.load %arg1[%c0_3, %c0_4] : memref<16x48xf32, #tpu.memory_space<vmem>>, vector<16x48xf32>
    %c0_5 = arith.constant 0 : index
    %c0_6 = arith.constant 0 : index
    %c0_7 = arith.constant 0 : index
    %4 = vector.load %arg6[%c0_5, %c0_6, %c0_7] : memref<2x8x128xf32, #tpu.memory_space<vmem>>, vector<1x8x128xf32>
    %5 = vector.shape_cast %4 : vector<1x8x128xf32> to vector<8x128xf32>
    %6 = vector.extract_strided_slice %5 {offsets = [0, 0], sizes = [1, 128], strides = [1, 1]} : vector<8x128xf32> to vector<1x128xf32>
    %7 = vector.extract_strided_slice %5 {offsets = [1, 0], sizes = [1, 128], strides = [1, 1]} : vector<8x128xf32> to vector<1x128xf32>
    %8 = vector.extract_strided_slice %5 {offsets = [2, 0], sizes = [1, 128], strides = [1, 1]} : vector<8x128xf32> to vector<1x128xf32>
    %9 = vector.extract_strided_slice %5 {offsets = [3, 0], sizes = [1, 128], strides = [1, 1]} : vector<8x128xf32> to vector<1x128xf32>
    %10 = vector.extract_strided_slice %5 {offsets = [4, 0], sizes = [1, 128], strides = [1, 1]} : vector<8x128xf32> to vector<1x128xf32>
    %11 = vector.extract_strided_slice %5 {offsets = [5, 0], sizes = [1, 128], strides = [1, 1]} : vector<8x128xf32> to vector<1x128xf32>
    %12 = vector.extract_strided_slice %5 {offsets = [6, 0], sizes = [1, 128], strides = [1, 1]} : vector<8x128xf32> to vector<1x128xf32>
    %13 = vector.extract_strided_slice %5 {offsets = [7, 0], sizes = [1, 128], strides = [1, 1]} : vector<8x128xf32> to vector<1x128xf32>
    %c0_8 = arith.constant 0 : index
    %c0_9 = arith.constant 0 : index
    %c0_10 = arith.constant 0 : index
    %14 = vector.load %arg3[%c0_8, %c0_9, %c0_10] : memref<2x512x128xbf16, #tpu.memory_space<vmem>>, vector<1x512x128xbf16>
    %15 = vector.shape_cast %14 : vector<1x512x128xbf16> to vector<512x128xbf16>
    %c0_11 = arith.constant 0 : index
    %c0_12 = arith.constant 0 : index
    %16 = vector.load %arg4[%c0_11, %c0_12] : memref<48x128xf32, #tpu.memory_space<vmem>>, vector<48x128xf32>
    %cst_13 = arith.constant dense<0.000000e+00> : vector<16x128xf32>
    %17 = tpu.matmul %3, %16, %cst_13 {dimension_numbers = #tpu.dot_dimension_numbers<[1], [0], [0], [1], [0, 0, 1, 1], [], []>} : vector<16x48xf32>, vector<48x128xf32>, vector<16x128xf32> -> vector<16x128xf32>
    %18 = vector.broadcast %7 : vector<1x128xf32> to vector<16x128xf32>
    %19 = arith.addf %17, %18 : vector<16x128xf32>
    %c0_14 = arith.constant 0 : index
    %c0_15 = arith.constant 0 : index
    %20 = vector.load %arg12[%c0_14, %c0_15] : memref<16x128xf32, #tpu.memory_space<vmem>>, vector<16x128xf32>
    tpu.vector_store %arg12[%c0_14, %c0_15], %19 {strides = array<i32>} : memref<16x128xf32, #tpu.memory_space<vmem>>, vector<16x128xf32>,
    %c0_i32 = arith.constant 0 : i32
    %c16_i32 = arith.constant 16 : i32
    %21 = arith.muli %c0_i32, %c16_i32 : i32
    %22 = tpu.assume_multiple %21, 8 : i32
    %23 = arith.index_cast %c0_i32 : i32 to index
    %c0_16 = arith.constant 0 : index
    %c0_17 = arith.constant 0 : index
    %24 = vector.load %arg2[%23, %c0_16, %c0_17] : memref<1x64x512xbf16, #tpu.memory_space<vmem>>, vector<1x64x512xbf16>
    %25 = vector.shape_cast %24 : vector<1x64x512xbf16> to vector<64x512xbf16>
    %cst_18 = arith.constant dense<0.000000e+00> : vector<64x128xf32>
    %26 = tpu.matmul %25, %15, %cst_18 {dimension_numbers = #tpu.dot_dimension_numbers<[1], [0], [0], [1], [0, 0, 1, 1], [], []>} : vector<64x512xbf16>, vector<512x128xbf16>, vector<64x128xf32> -> vector<64x128xf32>
    %27 = vector.broadcast %6 : vector<1x128xf32> to vector<64x128xf32>
    %28 = arith.addf %26, %27 : vector<64x128xf32>
    %29 = arith.index_cast %22 : i32 to index
    %c0_19 = arith.constant 0 : index
    %30 = vector.load %arg12[%29, %c0_19] : memref<16x128xf32, #tpu.memory_space<vmem>>, vector<16x128xf32>
    %31 = vector.extract_strided_slice %28 {offsets = [0, 0], sizes = [64, 32], strides = [1, 1]} : vector<64x128xf32> to vector<64x32xf32>
    %32 = vector.extract_strided_slice %30 {offsets = [0, 0], sizes = [16, 32], strides = [1, 1]} : vector<16x128xf32> to vector<16x32xf32>
    %cst_20 = arith.constant dense<0.000000e+00> : vector<16x64xf32>
    %33 = tpu.matmul %32, %31, %cst_20 {dimension_numbers = #tpu.dot_dimension_numbers<[1], [1], [0], [0], [0, 0, 1, 0], [], []>} : vector<16x32xf32>, vector<64x32xf32>, vector<16x64xf32> -> vector<16x64xf32>
    %cst_21 = arith.constant dense<0xFF800000> : vector<16xf32>
    %34 = vector.multi_reduction <maximumf>, %33, %cst_21 [1] : vector<16x64xf32> to vector<16xf32>
    %35 = vector.shape_cast %34 : vector<16xf32> to vector<16x1xf32>
    %36 = vector.broadcast %35 : vector<16x1xf32> to vector<16x64xf32>
    %37 = arith.subf %33, %36 : vector<16x64xf32>
    %38 = math.exp %37 : vector<16x64xf32>
    %cst_22 = arith.constant dense<0.000000e+00> : vector<16xf32>
    %39 = vector.multi_reduction <add>, %38, %cst_22 [1] : vector<16x64xf32> to vector<16xf32>
    %40 = vector.shape_cast %39 : vector<16xf32> to vector<16x1xf32>
    %41 = tpu.reciprocal %40 {approx = true} : vector<16x1xf32> -> vector<16x1xf32>
    %42 = vector.broadcast %41 : vector<16x1xf32> to vector<16x64xf32>
    %43 = arith.mulf %38, %42 : vector<16x64xf32>
    %cst_23 = arith.constant dense<0.000000e+00> : vector<16x32xf32>
    %44 = tpu.matmul %43, %31, %cst_23 {dimension_numbers = #tpu.dot_dimension_numbers<[1], [0], [0], [1], [0, 0, 1, 1], [], []>} : vector<16x64xf32>, vector<64x32xf32>, vector<16x32xf32> -> vector<16x32xf32>
    %45 = arith.index_cast %22 : i32 to index
    %c0_24 = arith.constant 0 : index
    %46 = vector.load %arg11[%45, %c0_24] : memref<16x128xf32, #tpu.memory_space<vmem>>, vector<16x32xf32>
    tpu.vector_store %arg11[%45, %c0_24], %44 {strides = array<i32>} : memref<16x128xf32, #tpu.memory_space<vmem>>, vector<16x32xf32>,
    %47 = vector.extract_strided_slice %28 {offsets = [0, 32], sizes = [64, 32], strides = [1, 1]} : vector<64x128xf32> to vector<64x32xf32>
    %48 = vector.extract_strided_slice %30 {offsets = [0, 32], sizes = [16, 32], strides = [1, 1]} : vector<16x128xf32> to vector<16x32xf32>
    %cst_25 = arith.constant dense<0.000000e+00> : vector<16x64xf32>
    %49 = tpu.matmul %48, %47, %cst_25 {dimension_numbers = #tpu.dot_dimension_numbers<[1], [1], [0], [0], [0, 0, 1, 0], [], []>} : vector<16x32xf32>, vector<64x32xf32>, vector<16x64xf32> -> vector<16x64xf32>
    %cst_26 = arith.constant dense<0xFF800000> : vector<16xf32>
    %50 = vector.multi_reduction <maximumf>, %49, %cst_26 [1] : vector<16x64xf32> to vector<16xf32>
    %51 = vector.shape_cast %50 : vector<16xf32> to vector<16x1xf32>
    %52 = vector.broadcast %51 : vector<16x1xf32> to vector<16x64xf32>
    %53 = arith.subf %49, %52 : vector<16x64xf32>
    %54 = math.exp %53 : vector<16x64xf32>
    %cst_27 = arith.constant dense<0.000000e+00> : vector<16xf32>
    %55 = vector.multi_reduction <add>, %54, %cst_27 [1] : vector<16x64xf32> to vector<16xf32>
    %56 = vector.shape_cast %55 : vector<16xf32> to vector<16x1xf32>
    %57 = tpu.reciprocal %56 {approx = true} : vector<16x1xf32> -> vector<16x1xf32>
    %58 = vector.broadcast %57 : vector<16x1xf32> to vector<16x64xf32>
    %59 = arith.mulf %54, %58 : vector<16x64xf32>
    %cst_28 = arith.constant dense<0.000000e+00> : vector<16x32xf32>
    %60 = tpu.matmul %59, %47, %cst_28 {dimension_numbers = #tpu.dot_dimension_numbers<[1], [0], [0], [1], [0, 0, 1, 1], [], []>} : vector<16x64xf32>, vector<64x32xf32>, vector<16x32xf32> -> vector<16x32xf32>
    %61 = arith.index_cast %22 : i32 to index
    %c32 = arith.constant 32 : index
    %62 = vector.load %arg11[%61, %c32] : memref<16x128xf32, #tpu.memory_space<vmem>>, vector<16x32xf32>
    tpu.vector_store %arg11[%61, %c32], %60 {strides = array<i32>} : memref<16x128xf32, #tpu.memory_space<vmem>>, vector<16x32xf32>,
    %c1_i32 = arith.constant 1 : i32
    %c0_29 = arith.constant 0 : index
    %c0_30 = arith.constant 0 : index
    %63 = vector.load %arg11[%c0_29, %c0_30] : memref<16x128xf32, #tpu.memory_space<vmem>>, vector<16x128xf32>
    %64 = arith.addf %63, %19 : vector<16x128xf32>
    %cst_31 = arith.constant dense<0.000000e+00> : vector<16x128xf32>
    %65 = tpu.matmul %64, %0, %cst_31 {dimension_numbers = #tpu.dot_dimension_numbers<[1], [0], [0], [1], [0, 0, 1, 1], [], []>} : vector<16x128xf32>, vector<128x128xf32>, vector<16x128xf32> -> vector<16x128xf32>
    %66 = arith.subf %64, %65 : vector<16x128xf32>
    %67 = arith.mulf %66, %66 : vector<16x128xf32>
    %cst_32 = arith.constant dense<0.000000e+00> : vector<16x128xf32>
    %68 = tpu.matmul %67, %0, %cst_32 {dimension_numbers = #tpu.dot_dimension_numbers<[1], [0], [0], [1], [0, 0, 1, 1], [], []>} : vector<16x128xf32>, vector<128x128xf32>, vector<16x128xf32> -> vector<16x128xf32>
    %cst_33 = arith.constant 9.99999974E-6 : f32
    %69 = vector.broadcast %cst_33 : f32 to vector<16x128xf32>
    %70 = arith.addf %68, %69 : vector<16x128xf32>
    %71 = math.rsqrt %70 : vector<16x128xf32>
    %72 = arith.mulf %66, %71 : vector<16x128xf32>
    %73 = vector.broadcast %8 : vector<1x128xf32> to vector<16x128xf32>
    %74 = arith.mulf %72, %73 : vector<16x128xf32>
    %75 = vector.broadcast %9 : vector<1x128xf32> to vector<16x128xf32>
    %76 = arith.addf %74, %75 : vector<16x128xf32>
    %c0_34 = arith.constant 0 : index
    %c0_35 = arith.constant 0 : index
    %c0_36 = arith.constant 0 : index
    %77 = vector.load %arg7[%c0_34, %c0_35, %c0_36] : memref<2x128x128xf32, #tpu.memory_space<vmem>>, vector<1x128x128xf32>
    %78 = vector.shape_cast %77 : vector<1x128x128xf32> to vector<128x128xf32>
    %cst_37 = arith.constant dense<0.000000e+00> : vector<16x128xf32>
    %79 = tpu.matmul %76, %78, %cst_37 {dimension_numbers = #tpu.dot_dimension_numbers<[1], [0], [0], [1], [0, 0, 1, 1], [], []>} : vector<16x128xf32>, vector<128x128xf32>, vector<16x128xf32> -> vector<16x128xf32>
    %80 = vector.broadcast %10 : vector<1x128xf32> to vector<16x128xf32>
    %81 = arith.addf %79, %80 : vector<16x128xf32>
    %cst_38 = arith.constant 0.000000e+00 : f32
    %82 = vector.broadcast %cst_38 : f32 to vector<16x128xf32>
    %83 = arith.maximumf %81, %82 : vector<16x128xf32>
    %c0_39 = arith.constant 0 : index
    %c0_40 = arith.constant 0 : index
    %c0_41 = arith.constant 0 : index
    %84 = vector.load %arg8[%c0_39, %c0_40, %c0_41] : memref<2x128x128xf32, #tpu.memory_space<vmem>>, vector<1x128x128xf32>
    %85 = vector.shape_cast %84 : vector<1x128x128xf32> to vector<128x128xf32>
    %cst_42 = arith.constant dense<0.000000e+00> : vector<16x128xf32>
    %86 = tpu.matmul %83, %85, %cst_42 {dimension_numbers = #tpu.dot_dimension_numbers<[1], [0], [0], [1], [0, 0, 1, 1], [], []>} : vector<16x128xf32>, vector<128x128xf32>, vector<16x128xf32> -> vector<16x128xf32>
    %87 = arith.addf %76, %86 : vector<16x128xf32>
    %88 = vector.broadcast %11 : vector<1x128xf32> to vector<16x128xf32>
    %89 = arith.addf %87, %88 : vector<16x128xf32>
    %cst_43 = arith.constant dense<0.000000e+00> : vector<16x128xf32>
    %90 = tpu.matmul %89, %0, %cst_43 {dimension_numbers = #tpu.dot_dimension_numbers<[1], [0], [0], [1], [0, 0, 1, 1], [], []>} : vector<16x128xf32>, vector<128x128xf32>, vector<16x128xf32> -> vector<16x128xf32>
    %91 = arith.subf %89, %90 : vector<16x128xf32>
    %92 = arith.mulf %91, %91 : vector<16x128xf32>
    %cst_44 = arith.constant dense<0.000000e+00> : vector<16x128xf32>
    %93 = tpu.matmul %92, %0, %cst_44 {dimension_numbers = #tpu.dot_dimension_numbers<[1], [0], [0], [1], [0, 0, 1, 1], [], []>} : vector<16x128xf32>, vector<128x128xf32>, vector<16x128xf32> -> vector<16x128xf32>
    %cst_45 = arith.constant 9.99999974E-6 : f32
    %94 = vector.broadcast %cst_45 : f32 to vector<16x128xf32>
    %95 = arith.addf %93, %94 : vector<16x128xf32>
    %96 = math.rsqrt %95 : vector<16x128xf32>
    %97 = arith.mulf %91, %96 : vector<16x128xf32>
    %98 = vector.broadcast %12 : vector<1x128xf32> to vector<16x128xf32>
    %99 = arith.mulf %97, %98 : vector<16x128xf32>
    %100 = vector.broadcast %13 : vector<1x128xf32> to vector<16x128xf32>
    %101 = arith.addf %99, %100 : vector<16x128xf32>
    %c1 = arith.constant 1 : index
    %c0_46 = arith.constant 0 : index
    %c0_47 = arith.constant 0 : index
    %102 = vector.load %arg6[%c1, %c0_46, %c0_47] : memref<2x8x128xf32, #tpu.memory_space<vmem>>, vector<1x8x128xf32>
    %103 = vector.shape_cast %102 : vector<1x8x128xf32> to vector<8x128xf32>
    %104 = vector.extract_strided_slice %103 {offsets = [0, 0], sizes = [1, 128], strides = [1, 1]} : vector<8x128xf32> to vector<1x128xf32>
    %105 = vector.extract_strided_slice %103 {offsets = [1, 0], sizes = [1, 128], strides = [1, 1]} : vector<8x128xf32> to vector<1x128xf32>
    %106 = vector.extract_strided_slice %103 {offsets = [2, 0], sizes = [1, 128], strides = [1, 1]} : vector<8x128xf32> to vector<1x128xf32>
    %107 = vector.extract_strided_slice %103 {offsets = [3, 0], sizes = [1, 128], strides = [1, 1]} : vector<8x128xf32> to vector<1x128xf32>
    %108 = vector.extract_strided_slice %103 {offsets = [4, 0], sizes = [1, 128], strides = [1, 1]} : vector<8x128xf32> to vector<1x128xf32>
    %109 = vector.extract_strided_slice %103 {offsets = [5, 0], sizes = [1, 128], strides = [1, 1]} : vector<8x128xf32> to vector<1x128xf32>
    %110 = vector.extract_strided_slice %103 {offsets = [6, 0], sizes = [1, 128], strides = [1, 1]} : vector<8x128xf32> to vector<1x128xf32>
    %111 = vector.extract_strided_slice %103 {offsets = [7, 0], sizes = [1, 128], strides = [1, 1]} : vector<8x128xf32> to vector<1x128xf32>
    %c1_48 = arith.constant 1 : index
    %c0_49 = arith.constant 0 : index
    %c0_50 = arith.constant 0 : index
    %112 = vector.load %arg3[%c1_48, %c0_49, %c0_50] : memref<2x512x128xbf16, #tpu.memory_space<vmem>>, vector<1x512x128xbf16>
    %113 = vector.shape_cast %112 : vector<1x512x128xbf16> to vector<512x128xbf16>
    %c0_51 = arith.constant 0 : index
    %c0_52 = arith.constant 0 : index
    %c0_53 = arith.constant 0 : index
    %114 = vector.load %arg5[%c0_51, %c0_52, %c0_53] : memref<1x128x128xf32, #tpu.memory_space<vmem>>, vector<1x128x128xf32>
    %115 = vector.shape_cast %114 : vector<1x128x128xf32> to vector<128x128xf32>
    %cst_54 = arith.constant dense<0.000000e+00> : vector<16x128xf32>
    %116 = tpu.matmul %101, %115, %cst_54 {dimension_numbers = #tpu.dot_dimension_numbers<[1], [0], [0], [1], [0, 0, 1, 1], [], []>} : vector<16x128xf32>, vector<128x128xf32>, vector<16x128xf32> -> vector<16x128xf32>
    %117 = vector.broadcast %105 : vector<1x128xf32> to vector<16x128xf32>
    %118 = arith.addf %116, %117 : vector<16x128xf32>
    %c0_55 = arith.constant 0 : index
    %c0_56 = arith.constant 0 : index
    %119 = vector.load %arg12[%c0_55, %c0_56] : memref<16x128xf32, #tpu.memory_space<vmem>>, vector<16x128xf32>
    tpu.vector_store %arg12[%c0_55, %c0_56], %118 {strides = array<i32>} : memref<16x128xf32, #tpu.memory_space<vmem>>, vector<16x128xf32>,
    %c0_i32_57 = arith.constant 0 : i32
    %c16_i32_58 = arith.constant 16 : i32
    %120 = arith.muli %c0_i32_57, %c16_i32_58 : i32
    %121 = tpu.assume_multiple %120, 8 : i32
    %122 = arith.index_cast %c0_i32_57 : i32 to index
    %c0_59 = arith.constant 0 : index
    %c0_60 = arith.constant 0 : index
    %123 = vector.load %arg2[%122, %c0_59, %c0_60] : memref<1x64x512xbf16, #tpu.memory_space<vmem>>, vector<1x64x512xbf16>
    %124 = vector.shape_cast %123 : vector<1x64x512xbf16> to vector<64x512xbf16>
    %cst_61 = arith.constant dense<0.000000e+00> : vector<64x128xf32>
    %125 = tpu.matmul %124, %113, %cst_61 {dimension_numbers = #tpu.dot_dimension_numbers<[1], [0], [0], [1], [0, 0, 1, 1], [], []>} : vector<64x512xbf16>, vector<512x128xbf16>, vector<64x128xf32> -> vector<64x128xf32>
    %126 = vector.broadcast %104 : vector<1x128xf32> to vector<64x128xf32>
    %127 = arith.addf %125, %126 : vector<64x128xf32>
    %128 = arith.index_cast %121 : i32 to index
    %c0_62 = arith.constant 0 : index
    %129 = vector.load %arg12[%128, %c0_62] : memref<16x128xf32, #tpu.memory_space<vmem>>, vector<16x128xf32>
    %130 = vector.extract_strided_slice %127 {offsets = [0, 0], sizes = [64, 32], strides = [1, 1]} : vector<64x128xf32> to vector<64x32xf32>
    %131 = vector.extract_strided_slice %129 {offsets = [0, 0], sizes = [16, 32], strides = [1, 1]} : vector<16x128xf32> to vector<16x32xf32>
    %cst_63 = arith.constant dense<0.000000e+00> : vector<16x64xf32>
    %132 = tpu.matmul %131, %130, %cst_63 {dimension_numbers = #tpu.dot_dimension_numbers<[1], [1], [0], [0], [0, 0, 1, 0], [], []>} : vector<16x32xf32>, vector<64x32xf32>, vector<16x64xf32> -> vector<16x64xf32>
    %cst_64 = arith.constant dense<0xFF800000> : vector<16xf32>
    %133 = vector.multi_reduction <maximumf>, %132, %cst_64 [1] : vector<16x64xf32> to vector<16xf32>
    %134 = vector.shape_cast %133 : vector<16xf32> to vector<16x1xf32>
    %135 = vector.broadcast %134 : vector<16x1xf32> to vector<16x64xf32>
    %136 = arith.subf %132, %135 : vector<16x64xf32>
    %137 = math.exp %136 : vector<16x64xf32>
    %cst_65 = arith.constant dense<0.000000e+00> : vector<16xf32>
    %138 = vector.multi_reduction <add>, %137, %cst_65 [1] : vector<16x64xf32> to vector<16xf32>
    %139 = vector.shape_cast %138 : vector<16xf32> to vector<16x1xf32>
    %140 = tpu.reciprocal %139 {approx = true} : vector<16x1xf32> -> vector<16x1xf32>
    %141 = vector.broadcast %140 : vector<16x1xf32> to vector<16x64xf32>
    %142 = arith.mulf %137, %141 : vector<16x64xf32>
    %cst_66 = arith.constant dense<0.000000e+00> : vector<16x32xf32>
    %143 = tpu.matmul %142, %130, %cst_66 {dimension_numbers = #tpu.dot_dimension_numbers<[1], [0], [0], [1], [0, 0, 1, 1], [], []>} : vector<16x64xf32>, vector<64x32xf32>, vector<16x32xf32> -> vector<16x32xf32>
    %144 = arith.index_cast %121 : i32 to index
    %c0_67 = arith.constant 0 : index
    %145 = vector.load %arg11[%144, %c0_67] : memref<16x128xf32, #tpu.memory_space<vmem>>, vector<16x32xf32>
    tpu.vector_store %arg11[%144, %c0_67], %143 {strides = array<i32>} : memref<16x128xf32, #tpu.memory_space<vmem>>, vector<16x32xf32>,
    %146 = vector.extract_strided_slice %127 {offsets = [0, 32], sizes = [64, 32], strides = [1, 1]} : vector<64x128xf32> to vector<64x32xf32>
    %147 = vector.extract_strided_slice %129 {offsets = [0, 32], sizes = [16, 32], strides = [1, 1]} : vector<16x128xf32> to vector<16x32xf32>
    %cst_68 = arith.constant dense<0.000000e+00> : vector<16x64xf32>
    %148 = tpu.matmul %147, %146, %cst_68 {dimension_numbers = #tpu.dot_dimension_numbers<[1], [1], [0], [0], [0, 0, 1, 0], [], []>} : vector<16x32xf32>, vector<64x32xf32>, vector<16x64xf32> -> vector<16x64xf32>
    %cst_69 = arith.constant dense<0xFF800000> : vector<16xf32>
    %149 = vector.multi_reduction <maximumf>, %148, %cst_69 [1] : vector<16x64xf32> to vector<16xf32>
    %150 = vector.shape_cast %149 : vector<16xf32> to vector<16x1xf32>
    %151 = vector.broadcast %150 : vector<16x1xf32> to vector<16x64xf32>
    %152 = arith.subf %148, %151 : vector<16x64xf32>
    %153 = math.exp %152 : vector<16x64xf32>
    %cst_70 = arith.constant dense<0.000000e+00> : vector<16xf32>
    %154 = vector.multi_reduction <add>, %153, %cst_70 [1] : vector<16x64xf32> to vector<16xf32>
    %155 = vector.shape_cast %154 : vector<16xf32> to vector<16x1xf32>
    %156 = tpu.reciprocal %155 {approx = true} : vector<16x1xf32> -> vector<16x1xf32>
    %157 = vector.broadcast %156 : vector<16x1xf32> to vector<16x64xf32>
    %158 = arith.mulf %153, %157 : vector<16x64xf32>
    %cst_71 = arith.constant dense<0.000000e+00> : vector<16x32xf32>
    %159 = tpu.matmul %158, %146, %cst_71 {dimension_numbers = #tpu.dot_dimension_numbers<[1], [0], [0], [1], [0, 0, 1, 1], [], []>} : vector<16x64xf32>, vector<64x32xf32>, vector<16x32xf32> -> vector<16x32xf32>
    %160 = arith.index_cast %121 : i32 to index
    %c32_72 = arith.constant 32 : index
    %161 = vector.load %arg11[%160, %c32_72] : memref<16x128xf32, #tpu.memory_space<vmem>>, vector<16x32xf32>
    tpu.vector_store %arg11[%160, %c32_72], %159 {strides = array<i32>} : memref<16x128xf32, #tpu.memory_space<vmem>>, vector<16x32xf32>,
    %c1_i32_73 = arith.constant 1 : i32
    %c0_74 = arith.constant 0 : index
    %c0_75 = arith.constant 0 : index
    %162 = vector.load %arg11[%c0_74, %c0_75] : memref<16x128xf32, #tpu.memory_space<vmem>>, vector<16x128xf32>
    %163 = arith.addf %162, %118 : vector<16x128xf32>
    %cst_76 = arith.constant dense<0.000000e+00> : vector<16x128xf32>
    %164 = tpu.matmul %163, %0, %cst_76 {dimension_numbers = #tpu.dot_dimension_numbers<[1], [0], [0], [1], [0, 0, 1, 1], [], []>} : vector<16x128xf32>, vector<128x128xf32>, vector<16x128xf32> -> vector<16x128xf32>
    %165 = arith.subf %163, %164 : vector<16x128xf32>
    %166 = arith.mulf %165, %165 : vector<16x128xf32>
    %cst_77 = arith.constant dense<0.000000e+00> : vector<16x128xf32>
    %167 = tpu.matmul %166, %0, %cst_77 {dimension_numbers = #tpu.dot_dimension_numbers<[1], [0], [0], [1], [0, 0, 1, 1], [], []>} : vector<16x128xf32>, vector<128x128xf32>, vector<16x128xf32> -> vector<16x128xf32>
    %cst_78 = arith.constant 9.99999974E-6 : f32
    %168 = vector.broadcast %cst_78 : f32 to vector<16x128xf32>
    %169 = arith.addf %167, %168 : vector<16x128xf32>
    %170 = math.rsqrt %169 : vector<16x128xf32>
    %171 = arith.mulf %165, %170 : vector<16x128xf32>
    %172 = vector.broadcast %106 : vector<1x128xf32> to vector<16x128xf32>
    %173 = arith.mulf %171, %172 : vector<16x128xf32>
    %174 = vector.broadcast %107 : vector<1x128xf32> to vector<16x128xf32>
    %175 = arith.addf %173, %174 : vector<16x128xf32>
    %c1_79 = arith.constant 1 : index
    %c0_80 = arith.constant 0 : index
    %c0_81 = arith.constant 0 : index
    %176 = vector.load %arg7[%c1_79, %c0_80, %c0_81] : memref<2x128x128xf32, #tpu.memory_space<vmem>>, vector<1x128x128xf32>
    %177 = vector.shape_cast %176 : vector<1x128x128xf32> to vector<128x128xf32>
    %cst_82 = arith.constant dense<0.000000e+00> : vector<16x128xf32>
    %178 = tpu.matmul %175, %177, %cst_82 {dimension_numbers = #tpu.dot_dimension_numbers<[1], [0], [0], [1], [0, 0, 1, 1], [], []>} : vector<16x128xf32>, vector<128x128xf32>, vector<16x128xf32> -> vector<16x128xf32>
    %179 = vector.broadcast %108 : vector<1x128xf32> to vector<16x128xf32>
    %180 = arith.addf %178, %179 : vector<16x128xf32>
    %cst_83 = arith.constant 0.000000e+00 : f32
    %181 = vector.broadcast %cst_83 : f32 to vector<16x128xf32>
    %182 = arith.maximumf %180, %181 : vector<16x128xf32>
    %c1_84 = arith.constant 1 : index
    %c0_85 = arith.constant 0 : index
    %c0_86 = arith.constant 0 : index
    %183 = vector.load %arg8[%c1_84, %c0_85, %c0_86] : memref<2x128x128xf32, #tpu.memory_space<vmem>>, vector<1x128x128xf32>
    %184 = vector.shape_cast %183 : vector<1x128x128xf32> to vector<128x128xf32>
    %cst_87 = arith.constant dense<0.000000e+00> : vector<16x128xf32>
    %185 = tpu.matmul %182, %184, %cst_87 {dimension_numbers = #tpu.dot_dimension_numbers<[1], [0], [0], [1], [0, 0, 1, 1], [], []>} : vector<16x128xf32>, vector<128x128xf32>, vector<16x128xf32> -> vector<16x128xf32>
    %186 = arith.addf %175, %185 : vector<16x128xf32>
    %187 = vector.broadcast %109 : vector<1x128xf32> to vector<16x128xf32>
    %188 = arith.addf %186, %187 : vector<16x128xf32>
    %cst_88 = arith.constant dense<0.000000e+00> : vector<16x128xf32>
    %189 = tpu.matmul %188, %0, %cst_88 {dimension_numbers = #tpu.dot_dimension_numbers<[1], [0], [0], [1], [0, 0, 1, 1], [], []>} : vector<16x128xf32>, vector<128x128xf32>, vector<16x128xf32> -> vector<16x128xf32>
    %190 = arith.subf %188, %189 : vector<16x128xf32>
    %191 = arith.mulf %190, %190 : vector<16x128xf32>
    %cst_89 = arith.constant dense<0.000000e+00> : vector<16x128xf32>
    %192 = tpu.matmul %191, %0, %cst_89 {dimension_numbers = #tpu.dot_dimension_numbers<[1], [0], [0], [1], [0, 0, 1, 1], [], []>} : vector<16x128xf32>, vector<128x128xf32>, vector<16x128xf32> -> vector<16x128xf32>
    %cst_90 = arith.constant 9.99999974E-6 : f32
    %193 = vector.broadcast %cst_90 : f32 to vector<16x128xf32>
    %194 = arith.addf %192, %193 : vector<16x128xf32>
    %195 = math.rsqrt %194 : vector<16x128xf32>
    %196 = arith.mulf %190, %195 : vector<16x128xf32>
    %197 = vector.broadcast %110 : vector<1x128xf32> to vector<16x128xf32>
    %198 = arith.mulf %196, %197 : vector<16x128xf32>
    %199 = vector.broadcast %111 : vector<1x128xf32> to vector<16x128xf32>
    %200 = arith.addf %198, %199 : vector<16x128xf32>
    %c0_91 = arith.constant 0 : index
    %c0_92 = arith.constant 0 : index
    %201 = vector.load %arg10[%c0_91, %c0_92] : memref<16x128xf32, #tpu.memory_space<vmem>>, vector<16x128xf32>
    tpu.vector_store %arg10[%c0_91, %c0_92], %200 {strides = array<i32>} : memref<16x128xf32, #tpu.memory_space<vmem>>, vector<16x128xf32>,
    return
  }
  func.func @transform_0(%arg0: i32) -> (i32, i32) {
    %c0_i32 = arith.constant 0 : i32
    %c0_i32_0 = arith.constant 0 : i32
    return %arg0, %c0_i32 : i32, i32
  }
  func.func @transform_1(%arg0: i32) -> (i32, i32, i32) {
    %c0_i32 = arith.constant 0 : i32
    %c0_i32_0 = arith.constant 0 : i32
    %c0_i32_1 = arith.constant 0 : i32
    return %arg0, %c0_i32, %c0_i32_0 : i32, i32, i32
  }
  func.func @transform_2(%arg0: i32) -> (i32, i32, i32) {
    %c0_i32 = arith.constant 0 : i32
    %c0_i32_0 = arith.constant 0 : i32
    %c0_i32_1 = arith.constant 0 : i32
    %c0_i32_2 = arith.constant 0 : i32
    return %c0_i32, %c0_i32_0, %c0_i32_1 : i32, i32, i32
  }
  func.func @transform_3(%arg0: i32) -> (i32, i32) {
    %c0_i32 = arith.constant 0 : i32
    %c0_i32_0 = arith.constant 0 : i32
    %c0_i32_1 = arith.constant 0 : i32
    return %c0_i32, %c0_i32_0 : i32, i32
  }
  func.func @transform_4(%arg0: i32) -> (i32, i32, i32) {
    %c0_i32 = arith.constant 0 : i32
    %c0_i32_0 = arith.constant 0 : i32
    %c0_i32_1 = arith.constant 0 : i32
    %c0_i32_2 = arith.constant 0 : i32
    return %c0_i32, %c0_i32_0, %c0_i32_1 : i32, i32, i32
  }
  func.func @transform_5(%arg0: i32) -> (i32, i32, i32) {
    %c0_i32 = arith.constant 0 : i32
    %c0_i32_0 = arith.constant 0 : i32
    %c0_i32_1 = arith.constant 0 : i32
    %c0_i32_2 = arith.constant 0 : i32
    return %c0_i32, %c0_i32_0, %c0_i32_1 : i32, i32, i32
  }
  func.func @transform_6(%arg0: i32) -> (i32, i32, i32) {
    %c0_i32 = arith.constant 0 : i32
    %c0_i32_0 = arith.constant 0 : i32
    %c0_i32_1 = arith.constant 0 : i32
    %c0_i32_2 = arith.constant 0 : i32
    return %c0_i32, %c0_i32_0, %c0_i32_1 : i32, i32, i32
  }
  func.func @transform_7(%arg0: i32) -> (i32, i32, i32) {
    %c0_i32 = arith.constant 0 : i32
    %c0_i32_0 = arith.constant 0 : i32
    %c0_i32_1 = arith.constant 0 : i32
    %c0_i32_2 = arith.constant 0 : i32
    return %c0_i32, %c0_i32_0, %c0_i32_1 : i32, i32, i32
  }
  func.func @transform_8(%arg0: i32) -> (i32, i32) {
    %c0_i32 = arith.constant 0 : i32
    %c0_i32_0 = arith.constant 0 : i32
    %c0_i32_1 = arith.constant 0 : i32
    return %c0_i32, %c0_i32_0 : i32, i32
  }
  func.func @transform_9(%arg0: i32) -> (i32, i32) {
    %c0_i32 = arith.constant 0 : i32
    %c0_i32_0 = arith.constant 0 : i32
    return %arg0, %c0_i32 : i32, i32
  }
}

</mosaic_0001>

<llo_original>
// kernel: tpu_custom_call.1
$region0: #{tpu_custom_call.1}
  #allocation0 [shape = 'u32[]', space=smem, size = 0x4, offset = 0x4, fixed_abs, tag = 'smem constant byte address 0x4 - core index']
  #allocation1 [shape = 'u32[72,128]{1,0:T(1,128)}', space=vmem, size = 0x9000, scoped, tag = 'internal scratch']
  #allocation2 [shape = 'f32[16,128]{1,0:T(8,128)}', space=vmem, size = 0x2000, scoped, tag = 'scratch operand']
  #allocation3 [shape = 'f32[16,128]{1,0:T(8,128)}', space=vmem, size = 0x2000, scoped, tag = 'scratch operand']
  %s0 = inlined_call_operand.hbm [shape: f32[32,48], index: 0, kind: input, shape index: {}]
  %s1 = inlined_call_operand.hbm [shape: bf16[2,64,512], index: 1, kind: input, shape index: {}]
  %s2 = inlined_call_operand.hbm [shape: bf16[2,512,128], index: 2, kind: input, shape index: {}]
  %s3 = inlined_call_operand.hbm [shape: f32[48,128], index: 3, kind: input, shape index: {}]
  %s4 = inlined_call_operand.hbm [shape: f32[1,128,128], index: 4, kind: input, shape index: {}]
  %s5 = inlined_call_operand.hbm [shape: f32[2,8,128], index: 5, kind: input, shape index: {}]
  %s6 = inlined_call_operand.hbm [shape: f32[2,128,128], index: 6, kind: input, shape index: {}]
  %s7 = inlined_call_operand.hbm [shape: f32[2,128,128], index: 7, kind: input, shape index: {}]
  %s8 = inlined_call_operand.hbm [shape: f32[128,128], index: 8, kind: input, shape index: {}]
  %s9 = inlined_call_operand.hbm [shape: f32[32,128], index: 9, kind: output, shape index: {}]
  %s10 = sld [smem:[#allocation0]]
  $region105: #{tpu_custom_call.1} parent=0
    _
  %s12 = ssub.s32 1, %s10
  %s13 = scalar_select 0, %s12, %s10
  $region1: #{tpu_custom_call.1} parent=0
    #allocation4 [shape = 'u8[16384]{0}', space=vmem, size = 0x4000, scoped, tag = 'input window, operand 0']
    #allocation5 [shape = 's32[2]{0}', space=sflag, size = 0x8, scoped, tag = 'scoped memory for tpu_custom_call.1']
    #allocation6 [shape = 's32[2]{0}', space=sflag, size = 0x8, scoped, tag = 'scoped memory for tpu_custom_call.1']
    #allocation7 [shape = 'u8[131072]{0}', space=vmem, size = 0x20000, scoped, tag = 'input window, operand 1']
    #allocation8 [shape = 's32[2]{0}', space=sflag, size = 0x8, scoped, tag = 'scoped memory for tpu_custom_call.1']
    #allocation9 [shape = 'u8[262144]{0}', space=vmem, size = 0x40000, scoped, tag = 'input window, operand 2, single buffered']
    #allocation10 [shape = 'u8[24576]{0}', space=vmem, size = 0x6000, scoped, tag = 'input window, operand 3, single buffered']
    #allocation11 [shape = 's32[1]{0}', space=sflag, size = 0x4, scoped, tag = 'scoped memory for tpu_custom_call.1']
    #allocation12 [shape = 'u8[65536]{0}', space=vmem, size = 0x10000, scoped, tag = 'input window, operand 4, single buffered']
    #allocation13 [shape = 'u8[8192]{0}', space=vmem, size = 0x2000, scoped, tag = 'input window, operand 5, single buffered']
    #allocation14 [shape = 's32[1]{0}', space=sflag, size = 0x4, scoped, tag = 'scoped memory for tpu_custom_call.1']
    #allocation15 [shape = 'u8[131072]{0}', space=vmem, size = 0x20000, scoped, tag = 'input window, operand 6, single buffered']
    #allocation16 [shape = 'u8[131072]{0}', space=vmem, size = 0x20000, scoped, tag = 'input window, operand 7, single buffered']
    #allocation17 [shape = 's32[1]{0}', space=sflag, size = 0x4, scoped, tag = 'scoped memory for tpu_custom_call.1']
    #allocation18 [shape = 'u8[65536]{0}', space=vmem, size = 0x10000, scoped, tag = 'input window, operand 8, single buffered']
    #allocation19 [shape = 'u8[16384]{0}', space=vmem, size = 0x4000, scoped, tag = 'output window, operand 0']
    %14 = vsyncpa [#allocation5], 0
    %s15 = scalar_lea.sflag [#allocation5], 1
    %16 = vsyncpa %s15, 0
    %17 = vsyncpa [#allocation8], 0
    %s18 = scalar_lea.sflag [#allocation8], 1
    %19 = vsyncpa %s18, 0
    %20 = vsyncpa [#allocation11], 0
    %21 = vsyncpa [#allocation14], 0
    %22 = vsyncpa [#allocation17], 0
    %23 = vsyncpa [#allocation6], 0
    %s24 = scalar_lea.sflag [#allocation6], 1
    %25 = vsyncpa %s24, 0
    loop: start=0, step=1, limit=4
    $region2: #{tpu_custom_call.1} parent=1 // loop_pre_header
      _
    $region3: #{tpu_custom_call.1} parent=1 // loop_header
      %s27 = sphi 0, %s31
      %p28 = scmp.ge.s32.totalorder %s27, 4
      %s37 = sphi 0, %s39
      %s40 = sphi 0, %s37
      %s41 = sphi 0, %s40
      %s57 = sphi 0, %s41
      %s63 = sphi 0, %s65
      %s66 = sphi 0, %s63
      %s67 = sphi 0, %s66
      %s83 = sphi 0, %s67
      %s87 = sphi 0, %s87
      %s89 = sphi 0, %s87
      %s90 = sphi 0, %s89
      %s104 = sphi 0, %s90
      %s108 = sphi 0, %s108
      %s110 = sphi 0, %s108
      %s111 = sphi 0, %s110
      %s125 = sphi 0, %s111
      %s129 = sphi 0, %s129
      %s131 = sphi 0, %s129
      %s132 = sphi 0, %s131
      %s146 = sphi 0, %s132
      %s150 = sphi 0, %s150
      %s152 = sphi 0, %s150
      %s153 = sphi 0, %s152
      %s167 = sphi 0, %s153
      %s171 = sphi 0, %s171
      %s173 = sphi 0, %s171
      %s174 = sphi 0, %s173
      %s188 = sphi 0, %s174
      %s192 = sphi 0, %s192
      %s194 = sphi 0, %s192
      %s195 = sphi 0, %s194
      %s209 = sphi 0, %s195
      %s213 = sphi 0, %s213
      %s215 = sphi 0, %s213
      %s216 = sphi 0, %s215
      %s230 = sphi 0, %s216
      %s236 = sphi 0, %s238
      %s239 = sphi 0, %s236
      %s240 = sphi 0, %s239
      %s256 = sphi 0, %s240
    $region4: #{tpu_custom_call.1} parent=1 // loop_header_branch
      %30 = sbr.rel (%p28) target = $region8
    $region5: #{tpu_custom_call.1} parent=1 // loop_body
      %s32 = ssub.s32 %s27, 1
      %s33 = ssub.s32 %s27, 2
      %s34 = sadd.s32 %s27, 1
      %s35 = ssub.s32 %s27, %s34
      %p36 = scmp.eq.s32.totalorder %s35, 0
      %s38 = sadd.s32 %s37, 1
      %s39 = scalar_select %p36, %s37, %s38
      %p42 = pneg %p36
      %p43 = scmp.eq.s32.totalorder %s27, 1
      %p44 = por %p42, %p43
      %p45 = scmp.ne.s32.totalorder %s37, %s40
      %p46 = scmp.eq.s32.totalorder %s27, 0
      %p47 = por %p45, %p46
      %p48 = scmp.ne.s32.totalorder %s37, %s40
      %p49 = scmp.eq.s32.totalorder %s32, 1
      %p50 = por %p48, %p49
      %p51 = scmp.ne.s32.totalorder %s40, %s41
      %p52 = scmp.eq.s32.totalorder %s32, 0
      %p53 = por %p51, %p52
      %p54 = scmp.ne.s32.totalorder %s40, %s41
      %p55 = scmp.eq.s32.totalorder %s33, 1
      %p56 = por %p54, %p55
      %p58 = scmp.ne.s32.totalorder %s41, %s57
      %p59 = scmp.eq.s32.totalorder %s33, 0
      %p60 = por %p58, %p59
      %s61 = ssub.s32 %s27, %s34
      %p62 = scmp.eq.s32.totalorder %s61, 0
      %s64 = sadd.s32 %s63, 1
      %s65 = scalar_select %p62, %s63, %s64
      %p68 = pneg %p62
      %p69 = scmp.eq.s32.totalorder %s27, 1
      %p70 = por %p68, %p69
      %p71 = scmp.ne.s32.totalorder %s63, %s66
      %p72 = scmp.eq.s32.totalorder %s27, 0
      %p73 = por %p71, %p72
      %p74 = scmp.ne.s32.totalorder %s63, %s66
      %p75 = scmp.eq.s32.totalorder %s32, 1
      %p76 = por %p74, %p75
      %p77 = scmp.ne.s32.totalorder %s66, %s67
      %p78 = scmp.eq.s32.totalorder %s32, 0
      %p79 = por %p77, %p78
      %p80 = scmp.ne.s32.totalorder %s66, %s67
      %p81 = scmp.eq.s32.totalorder %s33, 1
      %p82 = por %p80, %p81
      %p84 = scmp.ne.s32.totalorder %s67, %s83
      %p85 = scmp.eq.s32.totalorder %s33, 0
      %p86 = por %p84, %p85
      %s88 = sadd.s32 %s87, 1
      %p91 = scmp.eq.s32.totalorder %s27, 1
      %p92 = scmp.ne.s32.totalorder %s87, %s89
      %p93 = scmp.eq.s32.totalorder %s27, 0
      %p94 = por %p92, %p93
      %p95 = scmp.ne.s32.totalorder %s87, %s89
      %p96 = scmp.eq.s32.totalorder %s32, 1
      %p97 = por %p95, %p96
      %p98 = scmp.ne.s32.totalorder %s89, %s90
      %p99 = scmp.eq.s32.totalorder %s32, 0
      %p100 = por %p98, %p99
      %p101 = scmp.ne.s32.totalorder %s89, %s90
      %p102 = scmp.eq.s32.totalorder %s33, 1
      %p103 = por %p101, %p102
      %p105 = scmp.ne.s32.totalorder %s90, %s104
      %p106 = scmp.eq.s32.totalorder %s33, 0
      %p107 = por %p105, %p106
      %s109 = sadd.s32 %s108, 1
      %p112 = scmp.eq.s32.totalorder %s27, 1
      %p113 = scmp.ne.s32.totalorder %s108, %s110
      %p114 = scmp.eq.s32.totalorder %s27, 0
      %p115 = por %p113, %p114
      %p116 = scmp.ne.s32.totalorder %s108, %s110
      %p117 = scmp.eq.s32.totalorder %s32, 1
      %p118 = por %p116, %p117
      %p119 = scmp.ne.s32.totalorder %s110, %s111
      %p120 = scmp.eq.s32.totalorder %s32, 0
      %p121 = por %p119, %p120
      %p122 = scmp.ne.s32.totalorder %s110, %s111
      %p123 = scmp.eq.s32.totalorder %s33, 1
      %p124 = por %p122, %p123
      %p126 = scmp.ne.s32.totalorder %s111, %s125
      %p127 = scmp.eq.s32.totalorder %s33, 0
      %p128 = por %p126, %p127
      %s130 = sadd.s32 %s129, 1
      %p133 = scmp.eq.s32.totalorder %s27, 1
      %p134 = scmp.ne.s32.totalorder %s129, %s131
      %p135 = scmp.eq.s32.totalorder %s27, 0
      %p136 = por %p134, %p135
      %p137 = scmp.ne.s32.totalorder %s129, %s131
      %p138 = scmp.eq.s32.totalorder %s32, 1
      %p139 = por %p137, %p138
      %p140 = scmp.ne.s32.totalorder %s131, %s132
      %p141 = scmp.eq.s32.totalorder %s32, 0
      %p142 = por %p140, %p141
      %p143 = scmp.ne.s32.totalorder %s131, %s132
      %p144 = scmp.eq.s32.totalorder %s33, 1
      %p145 = por %p143, %p144
      %p147 = scmp.ne.s32.totalorder %s132, %s146
      %p148 = scmp.eq.s32.totalorder %s33, 0
      %p149 = por %p147, %p148
      %s151 = sadd.s32 %s150, 1
      %p154 = scmp.eq.s32.totalorder %s27, 1
      %p155 = scmp.ne.s32.totalorder %s150, %s152
      %p156 = scmp.eq.s32.totalorder %s27, 0
      %p157 = por %p155, %p156
      %p158 = scmp.ne.s32.totalorder %s150, %s152
      %p159 = scmp.eq.s32.totalorder %s32, 1
      %p160 = por %p158, %p159
      %p161 = scmp.ne.s32.totalorder %s152, %s153
      %p162 = scmp.eq.s32.totalorder %s32, 0
      %p163 = por %p161, %p162
      %p164 = scmp.ne.s32.totalorder %s152, %s153
      %p165 = scmp.eq.s32.totalorder %s33, 1
      %p166 = por %p164, %p165
      %p168 = scmp.ne.s32.totalorder %s153, %s167
      %p169 = scmp.eq.s32.totalorder %s33, 0
      %p170 = por %p168, %p169
      %s172 = sadd.s32 %s171, 1
      %p175 = scmp.eq.s32.totalorder %s27, 1
      %p176 = scmp.ne.s32.totalorder %s171, %s173
      %p177 = scmp.eq.s32.totalorder %s27, 0
      %p178 = por %p176, %p177
      %p179 = scmp.ne.s32.totalorder %s171, %s173
      %p180 = scmp.eq.s32.totalorder %s32, 1
      %p181 = por %p179, %p180
      %p182 = scmp.ne.s32.totalorder %s173, %s174
      %p183 = scmp.eq.s32.totalorder %s32, 0
      %p184 = por %p182, %p183
      %p185 = scmp.ne.s32.totalorder %s173, %s174
      %p186 = scmp.eq.s32.totalorder %s33, 1
      %p187 = por %p185, %p186
      %p189 = scmp.ne.s32.totalorder %s174, %s188
      %p190 = scmp.eq.s32.totalorder %s33, 0
      %p191 = por %p189, %p190
      %s193 = sadd.s32 %s192, 1
      %p196 = scmp.eq.s32.totalorder %s27, 1
      %p197 = scmp.ne.s32.totalorder %s192, %s194
      %p198 = scmp.eq.s32.totalorder %s27, 0
      %p199 = por %p197, %p198
      %p200 = scmp.ne.s32.totalorder %s192, %s194
      %p201 = scmp.eq.s32.totalorder %s32, 1
      %p202 = por %p200, %p201
      %p203 = scmp.ne.s32.totalorder %s194, %s195
      %p204 = scmp.eq.s32.totalorder %s32, 0
      %p205 = por %p203, %p204
      %p206 = scmp.ne.s32.totalorder %s194, %s195
      %p207 = scmp.eq.s32.totalorder %s33, 1
      %p208 = por %p206, %p207
      %p210 = scmp.ne.s32.totalorder %s195, %s209
      %p211 = scmp.eq.s32.totalorder %s33, 0
      %p212 = por %p210, %p211
      %s214 = sadd.s32 %s213, 1
      %p217 = scmp.eq.s32.totalorder %s27, 1
      %p218 = scmp.ne.s32.totalorder %s213, %s215
      %p219 = scmp.eq.s32.totalorder %s27, 0
      %p220 = por %p218, %p219
      %p221 = scmp.ne.s32.totalorder %s213, %s215
      %p222 = scmp.eq.s32.totalorder %s32, 1
      %p223 = por %p221, %p222
      %p224 = scmp.ne.s32.totalorder %s215, %s216
      %p225 = scmp.eq.s32.totalorder %s32, 0
      %p226 = por %p224, %p225
      %p227 = scmp.ne.s32.totalorder %s215, %s216
      %p228 = scmp.eq.s32.totalorder %s33, 1
      %p229 = por %p227, %p228
      %p231 = scmp.ne.s32.totalorder %s216, %s230
      %p232 = scmp.eq.s32.totalorder %s33, 0
      %p233 = por %p231, %p232
      %s234 = ssub.s32 %s27, %s34
      %p235 = scmp.eq.s32.totalorder %s234, 0
      %s237 = sadd.s32 %s236, 1
      %s238 = scalar_select %p235, %s236, %s237
      %p241 = pneg %p235
      %p242 = scmp.eq.s32.totalorder %s27, 1
      %p243 = por %p241, %p242
      %p244 = scmp.ne.s32.totalorder %s236, %s239
      %p245 = scmp.eq.s32.totalorder %s27, 0
      %p246 = por %p244, %p245
      %p247 = scmp.ne.s32.totalorder %s236, %s239
      %p248 = scmp.eq.s32.totalorder %s32, 1
      %p249 = por %p247, %p248
      %p250 = scmp.ne.s32.totalorder %s239, %s240
      %p251 = scmp.eq.s32.totalorder %s32, 0
      %p252 = por %p250, %p251
      %p253 = scmp.ne.s32.totalorder %s239, %s240
      %p254 = scmp.eq.s32.totalorder %s33, 1
      %p255 = por %p253, %p254
      %p257 = scmp.ne.s32.totalorder %s240, %s256
      %p258 = scmp.eq.s32.totalorder %s33, 0
      %p259 = por %p257, %p258
      %p260 = scmp.le.s32.totalorder 1, %s27
      %p261 = scmp.lt.s32.totalorder %s27, 3
      %p262 = pnand %p260, %p261
      %p263 = pneg %p262
      // Predicated region
      $region9: #{tpu_custom_call.1} parent=5 // pred_check
        _
      $region10: #{tpu_custom_call.1} parent=5 // pred_check_branch
        %265 = sbr.rel (%p262) target = $region12
      $region11: #{tpu_custom_call.1} parent=5 // pred_region
        %s266 = ssub.s32 %s27, 1
        // Predicated region
        $region13: #{tpu_custom_call.1} parent=11 // pred_check
          %p267 = pneg %p100
        $region14: #{tpu_custom_call.1} parent=11 // pred_check_branch
          %269 = sbr.rel (%p267) target = $region16
        $region15: #{tpu_custom_call.1} parent=11 // pred_region
          %271 = vsyncadd [#allocation8], 0
          %s272 = sshll.u32 %s2, 4
          %s273 = int_to_ptr.hbm [resolvable:$true] %s272
          %s274 = sshll.u32 [#allocation9], 4
          %s275 = int_to_ptr.vmem [resolvable:$true] %s274
          %280 = dma.hbm_to_vmem [thread:$0]  %s273, 8192, %s275, [#allocation8], 64, 64, 4
        $region16: #{tpu_custom_call.1} parent=11 // pred_fallthru
          _
        // Predicated region
        $region17: #{tpu_custom_call.1} parent=11 // pred_check
          %p281 = pneg %p121
        $region18: #{tpu_custom_call.1} parent=11 // pred_check_branch
          %283 = sbr.rel (%p281) target = $region20
        $region19: #{tpu_custom_call.1} parent=11 // pred_region
          %285 = vsyncadd [#allocation11], 0
          %s286 = sshll.u32 %s3, 4
          %s287 = int_to_ptr.hbm [resolvable:$true] %s286
          %s288 = sshll.u32 [#allocation10], 4
          %s289 = int_to_ptr.vmem [resolvable:$true] %s288
          %294 = dma.hbm_to_vmem [thread:$0]  %s287, 768, %s289, [#allocation11], 128, 128, 8
        $region20: #{tpu_custom_call.1} parent=11 // pred_fallthru
          _
        // Predicated region
        $region21: #{tpu_custom_call.1} parent=11 // pred_check
          %p295 = pneg %p142
        $region22: #{tpu_custom_call.1} parent=11 // pred_check_branch
          %297 = sbr.rel (%p295) target = $region24
        $region23: #{tpu_custom_call.1} parent=11 // pred_region
          %299 = vsyncadd [#allocation11], 0
          %s300 = sshll.u32 %s4, 4
          %s301 = int_to_ptr.hbm [resolvable:$true] %s300
          %s302 = sshll.u32 [#allocation12], 4
          %s303 = int_to_ptr.vmem [resolvable:$true] %s302
          %308 = dma.hbm_to_vmem [thread:$0]  %s301, 2048, %s303, [#allocation11], 128, 128, 8
        $region24: #{tpu_custom_call.1} parent=11 // pred_fallthru
          _
        // Predicated region
        $region25: #{tpu_custom_call.1} parent=11 // pred_check
          %p309 = pneg %p163
        $region26: #{tpu_custom_call.1} parent=11 // pred_check_branch
          %311 = sbr.rel (%p309) target = $region28
        $region27: #{tpu_custom_call.1} parent=11 // pred_region
          %313 = vsyncadd [#allocation14], 0
          %s314 = sshll.u32 %s5, 4
          %s315 = int_to_ptr.hbm [resolvable:$true] %s314
          %s316 = sshll.u32 [#allocation13], 4
          %s317 = int_to_ptr.vmem [resolvable:$true] %s316
          %322 = dma.hbm_to_vmem [thread:$0]  %s315, 256, %s317, [#allocation14], 128, 128, 8
        $region28: #{tpu_custom_call.1} parent=11 // pred_fallthru
          _
        // Predicated region
        $region29: #{tpu_custom_call.1} parent=11 // pred_check
          %p323 = pneg %p184
        $region30: #{tpu_custom_call.1} parent=11 // pred_check_branch
          %325 = sbr.rel (%p323) target = $region32
        $region31: #{tpu_custom_call.1} parent=11 // pred_region
          %327 = vsyncadd [#allocation14], 0
          %s328 = sshll.u32 %s6, 4
          %s329 = int_to_ptr.hbm [resolvable:$true] %s328
          %s330 = sshll.u32 [#allocation15], 4
          %s331 = int_to_ptr.vmem [resolvable:$true] %s330
          %336 = dma.hbm_to_vmem [thread:$0]  %s329, 4096, %s331, [#allocation14], 128, 128, 8
        $region32: #{tpu_custom_call.1} parent=11 // pred_fallthru
          _
        // Predicated region
        $region33: #{tpu_custom_call.1} parent=11 // pred_check
          %p337 = pneg %p205
        $region34: #{tpu_custom_call.1} parent=11 // pred_check_branch
          %339 = sbr.rel (%p337) target = $region36
        $region35: #{tpu_custom_call.1} parent=11 // pred_region
          %341 = vsyncadd [#allocation17], 0
          %s342 = sshll.u32 %s7, 4
          %s343 = int_to_ptr.hbm [resolvable:$true] %s342
          %s344 = sshll.u32 [#allocation16], 4
          %s345 = int_to_ptr.vmem [resolvable:$true] %s344
          %350 = dma.hbm_to_vmem [thread:$0]  %s343, 4096, %s345, [#allocation17], 128, 128, 8
        $region36: #{tpu_custom_call.1} parent=11 // pred_fallthru
          _
        // Predicated region
        $region37: #{tpu_custom_call.1} parent=11 // pred_check
          %p351 = pneg %p226
        $region38: #{tpu_custom_call.1} parent=11 // pred_check_branch
          %353 = sbr.rel (%p351) target = $region40
        $region39: #{tpu_custom_call.1} parent=11 // pred_region
          %355 = vsyncadd [#allocation17], 0
          %s356 = sshll.u32 %s8, 4
          %s357 = int_to_ptr.hbm [resolvable:$true] %s356
          %s358 = sshll.u32 [#allocation18], 4
          %s359 = int_to_ptr.vmem [resolvable:$true] %s358
          %364 = dma.hbm_to_vmem [thread:$0]  %s357, 2048, %s359, [#allocation17], 128, 128, 8
        $region40: #{tpu_custom_call.1} parent=11 // pred_fallthru
          _
      $region12: #{tpu_custom_call.1} parent=5 // pred_fallthru
        _
      %p365 = scmp.lt.s32.totalorder %s27, 2
      // Predicated region
      $region41: #{tpu_custom_call.1} parent=5 // pred_check
        %p366 = pneg %p365
      $region42: #{tpu_custom_call.1} parent=5 // pred_check_branch
        %368 = sbr.rel (%p366) target = $region44
      $region43: #{tpu_custom_call.1} parent=5 // pred_region
        // Predicated region
        $region45: #{tpu_custom_call.1} parent=43 // pred_check
          %p369 = pneg %p47
        $region46: #{tpu_custom_call.1} parent=43 // pred_check_branch
          %371 = sbr.rel (%p369) target = $region48
        $region47: #{tpu_custom_call.1} parent=43 // pred_region
          %s372 = sand.u32 %s37, 1
          %s373 = scalar_lea.sflag [#allocation5], %s372
          %s374 = sand.u32 %s37, 1
          %s375 = smul.addr %s374, 16
          %s376 = scalar_lea.vmem [#allocation4], %s375
          %s377 = smul.u32 2, %s27
          %379 = vsyncadd %s373, 0
          %s380 = smul.addr %s377, 8
          %s381 = scalar_lea.hbm %s0, %s380
          %s382 = sshll.u32 %s381, 4
          %s383 = int_to_ptr.hbm [resolvable:$true] %s382
          %s384 = sshll.u32 %s376, 4
          %s385 = int_to_ptr.vmem [resolvable:$true] %s384
          %390 = dma.hbm_to_vmem [thread:$0]  %s383, 256, %s385, %s373, 128, 128, 8
        $region48: #{tpu_custom_call.1} parent=43 // pred_fallthru
          _
        // Predicated region
        $region49: #{tpu_custom_call.1} parent=43 // pred_check
          %p391 = pneg %p73
        $region50: #{tpu_custom_call.1} parent=43 // pred_check_branch
          %393 = sbr.rel (%p391) target = $region52
        $region51: #{tpu_custom_call.1} parent=43 // pred_region
          %s394 = sand.u32 %s27, 1
          %s395 = scalar_lea.sflag [#allocation8], %s394
          %s396 = sand.u32 %s63, 1
          %s397 = smul.addr %s396, 128
          %s398 = scalar_lea.vmem [#allocation7], %s397
          %400 = vsyncadd %s395, 0
          %s401 = smul.addr %s27, 32
          %s402 = smul.addr %s401, 4
          %s403 = scalar_lea.hbm %s1, %s402
          %s404 = sshll.u32 %s403, 4
          %s405 = int_to_ptr.hbm [resolvable:$true] %s404
          %s406 = sshll.u32 %s398, 4
          %s407 = int_to_ptr.vmem [resolvable:$true] %s406
          %412 = dma.hbm_to_vmem [thread:$0]  %s405, 2048, %s407, %s395, 256, 256, 16
        $region52: #{tpu_custom_call.1} parent=43 // pred_fallthru
          _
      $region44: #{tpu_custom_call.1} parent=5 // pred_fallthru
        _
      %p413 = scmp.le.s32.totalorder 1, %s27
      %p414 = scmp.lt.s32.totalorder %s27, 3
      %p415 = pnand %p413, %p414
      %p416 = pneg %p415
      // Predicated region
      $region53: #{tpu_custom_call.1} parent=5 // pred_check
        _
      $region54: #{tpu_custom_call.1} parent=5 // pred_check_branch
        %418 = sbr.rel (%p415) target = $region56
      $region55: #{tpu_custom_call.1} parent=5 // pred_region
        %s419 = ssub.s32 %s27, 1
        %s420 = sand.u32 %s40, 1
        %s421 = scalar_lea.sflag [#allocation5], %s420
        %s422 = sand.u32 %s40, 1
        %s423 = smul.addr %s422, 16
        %s424 = scalar_lea.vmem [#allocation4], %s423
        // Predicated region
        $region57: #{tpu_custom_call.1} parent=55 // pred_check
          %p425 = pneg %p53
        $region58: #{tpu_custom_call.1} parent=55 // pred_check_branch
          %427 = sbr.rel (%p425) target = $region60
        $region59: #{tpu_custom_call.1} parent=55 // pred_region
          %429 = dma.done %s421, 256
        $region60: #{tpu_custom_call.1} parent=55 // pred_fallthru
          _
        %s430 = sand.u32 %s32, 1
        %s431 = scalar_lea.sflag [#allocation8], %s430
        %s432 = sand.u32 %s66, 1
        %s433 = smul.addr %s432, 128
        %s434 = scalar_lea.vmem [#allocation7], %s433
        // Predicated region
        $region61: #{tpu_custom_call.1} parent=55 // pred_check
          %p435 = pneg %p79
        $region62: #{tpu_custom_call.1} parent=55 // pred_check_branch
          %437 = sbr.rel (%p435) target = $region64
        $region63: #{tpu_custom_call.1} parent=55 // pred_region
          %439 = dma.done %s431, 2048
        $region64: #{tpu_custom_call.1} parent=55 // pred_fallthru
          _
        // Predicated region
        $region65: #{tpu_custom_call.1} parent=55 // pred_check
          %p440 = pneg %p100
        $region66: #{tpu_custom_call.1} parent=55 // pred_check_branch
          %442 = sbr.rel (%p440) target = $region68
        $region67: #{tpu_custom_call.1} parent=55 // pred_region
          %444 = dma.done [#allocation8], 8192
        $region68: #{tpu_custom_call.1} parent=55 // pred_fallthru
          _
        // Predicated region
        $region69: #{tpu_custom_call.1} parent=55 // pred_check
          %p445 = pneg %p121
        $region70: #{tpu_custom_call.1} parent=55 // pred_check_branch
          %447 = sbr.rel (%p445) target = $region72
        $region71: #{tpu_custom_call.1} parent=55 // pred_region
          %449 = dma.done [#allocation11], 768
        $region72: #{tpu_custom_call.1} parent=55 // pred_fallthru
          _
        // Predicated region
        $region73: #{tpu_custom_call.1} parent=55 // pred_check
          %p450 = pneg %p142
        $region74: #{tpu_custom_call.1} parent=55 // pred_check_branch
          %452 = sbr.rel (%p450) target = $region76
        $region75: #{tpu_custom_call.1} parent=55 // pred_region
          %454 = dma.done [#allocation11], 2048
        $region76: #{tpu_custom_call.1} parent=55 // pred_fallthru
          _
        // Predicated region
        $region77: #{tpu_custom_call.1} parent=55 // pred_check
          %p455 = pneg %p163
        $region78: #{tpu_custom_call.1} parent=55 // pred_check_branch
          %457 = sbr.rel (%p455) target = $region80
        $region79: #{tpu_custom_call.1} parent=55 // pred_region
          %459 = dma.done [#allocation14], 256
        $region80: #{tpu_custom_call.1} parent=55 // pred_fallthru
          _
        // Predicated region
        $region81: #{tpu_custom_call.1} parent=55 // pred_check
          %p460 = pneg %p184
        $region82: #{tpu_custom_call.1} parent=55 // pred_check_branch
          %462 = sbr.rel (%p460) target = $region84
        $region83: #{tpu_custom_call.1} parent=55 // pred_region
          %464 = dma.done [#allocation14], 4096
        $region84: #{tpu_custom_call.1} parent=55 // pred_fallthru
          _
        // Predicated region
        $region85: #{tpu_custom_call.1} parent=55 // pred_check
          %p465 = pneg %p205
        $region86: #{tpu_custom_call.1} parent=55 // pred_check_branch
          %467 = sbr.rel (%p465) target = $region88
        $region87: #{tpu_custom_call.1} parent=55 // pred_region
          %469 = dma.done [#allocation17], 4096
        $region88: #{tpu_custom_call.1} parent=55 // pred_fallthru
          _
        // Predicated region
        $region89: #{tpu_custom_call.1} parent=55 // pred_check
          %p470 = pneg %p226
        $region90: #{tpu_custom_call.1} parent=55 // pred_check_branch
          %472 = sbr.rel (%p470) target = $region92
        $region91: #{tpu_custom_call.1} parent=55 // pred_region
          %474 = dma.done [#allocation17], 2048
        $region92: #{tpu_custom_call.1} parent=55 // pred_fallthru
          _
        %s475 = sand.u32 %s40, 1
        %s476 = scalar_lea.sflag [#allocation5], %s475
        %s477 = sand.u32 %s40, 1
        %s478 = smul.addr %s477, 16
        %s479 = scalar_lea.vmem [#allocation4], %s478
        %p480 = pneg %p53
        %p481 = pneg %p50
        %s482 = sand.u32 %s32, 1
        %s483 = scalar_lea.sflag [#allocation8], %s482
        %s484 = sand.u32 %s66, 1
        %s485 = smul.addr %s484, 128
        %s486 = scalar_lea.vmem [#allocation7], %s485
        %p487 = pneg %p79
        %p488 = pneg %p76
        %p489 = pneg %p100
        %p490 = pneg %p97
        %p491 = pneg %p121
        %p492 = pneg %p118
        %p493 = pneg %p142
        %p494 = pneg %p139
        %p495 = pneg %p163
        %p496 = pneg %p160
        %p497 = pneg %p184
        %p498 = pneg %p181
        %p499 = pneg %p205
        %p500 = pneg %p202
        %p501 = pneg %p226
        %p502 = pneg %p223
        %p503 = pneg %p252
        %p504 = pneg %p249
        %s505 = sand.u32 %s239, 1
        %s506 = scalar_lea.sflag [#allocation6], %s505
        %s507 = sand.u32 %s239, 1
        %s508 = smul.addr %s507, 16
        %s509 = scalar_lea.vmem [#allocation19], %s508
        %s510 = smul.u32 2, %s32
        %s511 = smul.u32 2, %s32
        %v512 = vld [vmem:[#allocation18] sm:$0xff]
        %v513 = vld [vmem:[#allocation18 + $0x8] sm:$0xff]
        %v514 = vld [vmem:[#allocation18 + $0x10] sm:$0xff]
        %v515 = vld [vmem:[#allocation18 + $0x18] sm:$0xff]
        %v516 = vld [vmem:[#allocation18 + $0x20] sm:$0xff]
        %v517 = vld [vmem:[#allocation18 + $0x28] sm:$0xff]
        %v518 = vld [vmem:[#allocation18 + $0x30] sm:$0xff]
        %v519 = vld [vmem:[#allocation18 + $0x38] sm:$0xff]
        %v520 = vld [vmem:[#allocation18 + $0x40] sm:$0xff]
        %v521 = vld [vmem:[#allocation18 + $0x48] sm:$0xff]
        %v522 = vld [vmem:[#allocation18 + $0x50] sm:$0xff]
        %v523 = vld [vmem:[#allocation18 + $0x58] sm:$0xff]
        %v524 = vld [vmem:[#allocation18 + $0x60] sm:$0xff]
        %v525 = vld [vmem:[#allocation18 + $0x68] sm:$0xff]
        %v526 = vld [vmem:[#allocation18 + $0x70] sm:$0xff]
        %v527 = vld [vmem:[#allocation18 + $0x78] sm:$0xff]
        %528 = vst [vmem:[#allocation2] sm:$0xff] 0.0
        %529 = vst [vmem:[#allocation2 + $0x8] sm:$0xff] 0.0
        %v530 = vld [vmem:[%s424] sm:$0xff]
        %v531 = vld [vmem:[%s424 + $0x8] sm:$0xff]
        %v532 = vld [vmem:[#allocation13] sm:$0xff]
        %v533 = vld [vmem:[#allocation9] sm:$0xf]
        %v534 = vld [vmem:[#allocation9 + $0x4] sm:$0xf]
        %v535 = vld [vmem:[#allocation9 + $0x8] sm:$0xf]
        %v536 = vld [vmem:[#allocation9 + $0xc] sm:$0xf]
        %v537 = vld [vmem:[#allocation9 + $0x10] sm:$0xf]
        %v538 = vld [vmem:[#allocation9 + $0x14] sm:$0xf]
        %v539 = vld [vmem:[#allocation9 + $0x18] sm:$0xf]
        %v540 = vld [vmem:[#allocation9 + $0x1c] sm:$0xf]
        %v541 = vld [vmem:[#allocation9 + $0x20] sm:$0xf]
        %v542 = vld [vmem:[#allocation9 + $0x24] sm:$0xf]
        %v543 = vld [vmem:[#allocation9 + $0x28] sm:$0xf]
        %v544 = vld [vmem:[#allocation9 + $0x2c] sm:$0xf]
        %v545 = vld [vmem:[#allocation9 + $0x30] sm:$0xf]
        %v546 = vld [vmem:[#allocation9 + $0x34] sm:$0xf]
        %v547 = vld [vmem:[#allocation9 + $0x38] sm:$0xf]
        %v548 = vld [vmem:[#allocation9 + $0x3c] sm:$0xf]
        %v549 = vld [vmem:[#allocation9 + $0x40] sm:$0xf]
        %v550 = vld [vmem:[#allocation9 + $0x44] sm:$0xf]
        %v551 = vld [vmem:[#allocation9 + $0x48] sm:$0xf]
        %v552 = vld [vmem:[#allocation9 + $0x4c] sm:$0xf]
        %v553 = vld [vmem:[#allocation9 + $0x50] sm:$0xf]
        %v554 = vld [vmem:[#allocation9 + $0x54] sm:$0xf]
        %v555 = vld [vmem:[#allocation9 + $0x58] sm:$0xf]
        %v556 = vld [vmem:[#allocation9 + $0x5c] sm:$0xf]
        %v557 = vld [vmem:[#allocation9 + $0x60] sm:$0xf]
        %v558 = vld [vmem:[#allocation9 + $0x64] sm:$0xf]
        %v559 = vld [vmem:[#allocation9 + $0x68] sm:$0xf]
        %v560 = vld [vmem:[#allocation9 + $0x6c] sm:$0xf]
        %v561 = vld [vmem:[#allocation9 + $0x70] sm:$0xf]
        %v562 = vld [vmem:[#allocation9 + $0x74] sm:$0xf]
        %v563 = vld [vmem:[#allocation9 + $0x78] sm:$0xf]
        %v564 = vld [vmem:[#allocation9 + $0x7c] sm:$0xf]
        %v565 = vld [vmem:[#allocation9 + $0x80] sm:$0xf]
        %v566 = vld [vmem:[#allocation9 + $0x84] sm:$0xf]
        %v567 = vld [vmem:[#allocation9 + $0x88] sm:$0xf]
        %v568 = vld [vmem:[#allocation9 + $0x8c] sm:$0xf]
        %v569 = vld [vmem:[#allocation9 + $0x90] sm:$0xf]
        %v570 = vld [vmem:[#allocation9 + $0x94] sm:$0xf]
        %v571 = vld [vmem:[#allocation9 + $0x98] sm:$0xf]
        %v572 = vld [vmem:[#allocation9 + $0x9c] sm:$0xf]
        %v573 = vld [vmem:[#allocation9 + $0xa0] sm:$0xf]
        %v574 = vld [vmem:[#allocation9 + $0xa4] sm:$0xf]
        %v575 = vld [vmem:[#allocation9 + $0xa8] sm:$0xf]
        %v576 = vld [vmem:[#allocation9 + $0xac] sm:$0xf]
        %v577 = vld [vmem:[#allocation9 + $0xb0] sm:$0xf]
        %v578 = vld [vmem:[#allocation9 + $0xb4] sm:$0xf]
        %v579 = vld [vmem:[#allocation9 + $0xb8] sm:$0xf]
        %v580 = vld [vmem:[#allocation9 + $0xbc] sm:$0xf]
        %v581 = vld [vmem:[#allocation9 + $0xc0] sm:$0xf]
        %v582 = vld [vmem:[#allocation9 + $0xc4] sm:$0xf]
        %v583 = vld [vmem:[#allocation9 + $0xc8] sm:$0xf]
        %v584 = vld [vmem:[#allocation9 + $0xcc] sm:$0xf]
        %v585 = vld [vmem:[#allocation9 + $0xd0] sm:$0xf]
        %v586 = vld [vmem:[#allocation9 + $0xd4] sm:$0xf]
        %v587 = vld [vmem:[#allocation9 + $0xd8] sm:$0xf]
        %v588 = vld [vmem:[#allocation9 + $0xdc] sm:$0xf]
        %v589 = vld [vmem:[#allocation9 + $0xe0] sm:$0xf]
        %v590 = vld [vmem:[#allocation9 + $0xe4] sm:$0xf]
        %v591 = vld [vmem:[#allocation9 + $0xe8] sm:$0xf]
        %v592 = vld [vmem:[#allocation9 + $0xec] sm:$0xf]
        %v593 = vld [vmem:[#allocation9 + $0xf0] sm:$0xf]
        %v594 = vld [vmem:[#allocation9 + $0xf4] sm:$0xf]
        %v595 = vld [vmem:[#allocation9 + $0xf8] sm:$0xf]
        %v596 = vld [vmem:[#allocation9 + $0xfc] sm:$0xf]
        %v597 = vld [vmem:[#allocation10] sm:$0xff]
        %v598 = vld [vmem:[#allocation10 + $0x8] sm:$0xff]
        %v599 = vld [vmem:[#allocation10 + $0x10] sm:$0xff]
        %v600 = vld [vmem:[#allocation10 + $0x18] sm:$0xff]
        %v601 = vld [vmem:[#allocation10 + $0x20] sm:$0xff]
        %v602 = vld [vmem:[#allocation10 + $0x28] sm:$0xff]
        %v603 = vperm.slane %v532, 1
        %vm604 = vcmask 392192
        %v606 = vsel %vm604, %v530, 0
        %v609 = vsel %vm604, %v531, 0
        %611 = vmatpush.msra.mxu0 0.0
        %612 = vmatpush.msra.mxu0 0.0
        %613 = vmatpush.msra.mxu0 0.0
        %614 = vmatpush.msra.mxu0 0.0
        %615 = vmatpush.msra.mxu0 0.0
        %616 = vmatpush.msra.mxu0 0.0
        %617 = vmatpush.msra.mxu0 0.0
        %618 = vmatpush.msra.mxu0 0.0
        %619 = vmatpush.msra.mxu0 0.0
        %620 = vmatpush.msra.mxu0 0.0
        %621 = vmatpush.msra.mxu0 %v602
        %622 = vmatpush.msra.mxu0 %v601
        %623 = vmatpush.msra.mxu0 %v600
        %624 = vmatpush.msra.mxu0 %v599
        %625 = vmatpush.msra.mxu0 %v598
        %626 = vmatpush.msra.mxu0 %v597
        %627 = vmatmul.f32.gmra.mxu0 %v606
        %v628 = vpop.f32.mrf.mxu0
        %v629 = vadd.f32 %v603, %v628
        %630 = vmatmul.f32.gmra.mxu0 %v609
        %v631 = vpop.f32.mrf.mxu0
        %v632 = vadd.f32 %v603, %v631
        %633 = vdwg.mxu0
        %634 = vst [vmem:[#allocation3] sm:$0xff] %v629
        %635 = vst [vmem:[#allocation3 + $0x8] sm:$0xff] %v632
        %v636 = vld [vmem:[%s434] sm:$0xff]
        %v637 = vld [vmem:[%s434 + $0x8] sm:$0xff]
        %v638 = vld [vmem:[%s434 + $0x10] sm:$0xff]
        %v639 = vld [vmem:[%s434 + $0x18] sm:$0xff]
        %v640 = vld [vmem:[%s434 + $0x20] sm:$0xff]
        %v641 = vld [vmem:[%s434 + $0x28] sm:$0xff]
        %v642 = vld [vmem:[%s434 + $0x30] sm:$0xff]
        %v643 = vld [vmem:[%s434 + $0x38] sm:$0xff]
        %v644 = vld [vmem:[%s434 + $0x40] sm:$0xff]
        %v645 = vld [vmem:[%s434 + $0x48] sm:$0xff]
        %v646 = vld [vmem:[%s434 + $0x50] sm:$0xff]
        %v647 = vld [vmem:[%s434 + $0x58] sm:$0xff]
        %v648 = vld [vmem:[%s434 + $0x60] sm:$0xff]
        %v649 = vld [vmem:[%s434 + $0x68] sm:$0xff]
        %v650 = vld [vmem:[%s434 + $0x70] sm:$0xff]
        %v651 = vld [vmem:[%s434 + $0x78] sm:$0xff]
        %v652 = vperm.slane %v532, 0
        %v669 = vunpack.c.l.b16 %v636
        %v670 = vunpack.c.h.b16 %v636
        %v671 = vunpack.c.l.b16 %v637
        %v672 = vunpack.c.h.b16 %v637
        %v673 = vunpack.c.l.b16 %v638
        %v674 = vunpack.c.h.b16 %v638
        %v675 = vunpack.c.l.b16 %v639
        %v676 = vunpack.c.h.b16 %v639
        %v677 = vunpack.c.l.b16 %v640
        %v678 = vunpack.c.h.b16 %v640
        %v679 = vunpack.c.l.b16 %v641
        %v680 = vunpack.c.h.b16 %v641
        %v681 = vunpack.c.l.b16 %v642
        %v682 = vunpack.c.h.b16 %v642
        %v683 = vunpack.c.l.b16 %v643
        %v684 = vunpack.c.h.b16 %v643
        %v685 = vunpack.c.l.b16 %v644
        %v686 = vunpack.c.h.b16 %v644
        %v687 = vunpack.c.l.b16 %v645
        %v688 = vunpack.c.h.b16 %v645
        %v689 = vunpack.c.l.b16 %v646
        %v690 = vunpack.c.h.b16 %v646
        %v691 = vunpack.c.l.b16 %v647
        %v692 = vunpack.c.h.b16 %v647
        %v693 = vunpack.c.l.b16 %v648
        %v694 = vunpack.c.h.b16 %v648
        %v695 = vunpack.c.l.b16 %v649
        %v696 = vunpack.c.h.b16 %v649
        %v697 = vunpack.c.l.b16 %v650
        %v698 = vunpack.c.h.b16 %v650
        %v699 = vunpack.c.l.b16 %v651
        %v700 = vunpack.c.h.b16 %v651
        %v701 = vpack.c.b16 %v673, %v669
        %v702 = vpack.c.b16 %v674, %v670
        %v703 = vpack.c.b16 %v675, %v671
        %v704 = vpack.c.b16 %v676, %v672
        %v705 = vpack.c.b16 %v681, %v677
        %v706 = vpack.c.b16 %v682, %v678
        %v707 = vpack.c.b16 %v683, %v679
        %v708 = vpack.c.b16 %v684, %v680
        %v709 = vpack.c.b16 %v689, %v685
        %v710 = vpack.c.b16 %v690, %v686
        %v711 = vpack.c.b16 %v691, %v687
        %v712 = vpack.c.b16 %v692, %v688
        %v713 = vpack.c.b16 %v697, %v693
        %v714 = vpack.c.b16 %v698, %v694
        %v715 = vpack.c.b16 %v699, %v695
        %v716 = vpack.c.b16 %v700, %v696
        %v797 = vunpack.c.l.b16 %v533
        %v798 = vunpack.c.l.b16 %v534
        %v799 = vunpack.c.l.b16 %v535
        %v800 = vunpack.c.l.b16 %v536
        %v801 = vunpack.c.l.b16 %v537
        %v802 = vunpack.c.l.b16 %v538
        %v803 = vunpack.c.l.b16 %v539
        %v804 = vunpack.c.l.b16 %v540
        %v805 = vunpack.c.l.b16 %v541
        %v806 = vunpack.c.l.b16 %v542
        %v807 = vunpack.c.l.b16 %v543
        %v808 = vunpack.c.l.b16 %v544
        %v809 = vunpack.c.l.b16 %v545
        %v810 = vunpack.c.l.b16 %v546
        %v811 = vunpack.c.l.b16 %v547
        %v812 = vunpack.c.l.b16 %v548
        %v813 = vunpack.c.l.b16 %v549
        %v814 = vunpack.c.l.b16 %v550
        %v815 = vunpack.c.l.b16 %v551
        %v816 = vunpack.c.l.b16 %v552
        %v817 = vunpack.c.l.b16 %v553
        %v818 = vunpack.c.l.b16 %v554
        %v819 = vunpack.c.l.b16 %v555
        %v820 = vunpack.c.l.b16 %v556
        %v821 = vunpack.c.l.b16 %v557
        %v822 = vunpack.c.l.b16 %v558
        %v823 = vunpack.c.l.b16 %v559
        %v824 = vunpack.c.l.b16 %v560
        %v825 = vunpack.c.l.b16 %v561
        %v826 = vunpack.c.l.b16 %v562
        %v827 = vunpack.c.l.b16 %v563
        %v828 = vunpack.c.l.b16 %v564
        %v829 = vunpack.c.l.b16 %v565
        %v830 = vunpack.c.l.b16 %v566
        %v831 = vunpack.c.l.b16 %v567
        %v832 = vunpack.c.l.b16 %v568
        %v833 = vunpack.c.l.b16 %v569
        %v834 = vunpack.c.l.b16 %v570
        %v835 = vunpack.c.l.b16 %v571
        %v836 = vunpack.c.l.b16 %v572
        %v837 = vunpack.c.l.b16 %v573
        %v838 = vunpack.c.l.b16 %v574
        %v839 = vunpack.c.l.b16 %v575
        %v840 = vunpack.c.l.b16 %v576
        %v841 = vunpack.c.l.b16 %v577
        %v842 = vunpack.c.l.b16 %v578
        %v843 = vunpack.c.l.b16 %v579
        %v844 = vunpack.c.l.b16 %v580
        %v845 = vunpack.c.l.b16 %v581
        %v846 = vunpack.c.l.b16 %v582
        %v847 = vunpack.c.l.b16 %v583
        %v848 = vunpack.c.l.b16 %v584
        %v849 = vunpack.c.l.b16 %v585
        %v850 = vunpack.c.l.b16 %v586
        %v851 = vunpack.c.l.b16 %v587
        %v852 = vunpack.c.l.b16 %v588
        %v853 = vunpack.c.l.b16 %v589
        %v854 = vunpack.c.l.b16 %v590
        %v855 = vunpack.c.l.b16 %v591
        %v856 = vunpack.c.l.b16 %v592
        %v857 = vunpack.c.l.b16 %v593
        %v858 = vunpack.c.l.b16 %v594
        %v859 = vunpack.c.l.b16 %v595
        %v860 = vunpack.c.l.b16 %v596
        %v861 = vpack.c.b16 %v798, %v797
        %v862 = vpack.c.b16 %v800, %v799
        %v863 = vpack.c.b16 %v802, %v801
        %v864 = vpack.c.b16 %v804, %v803
        %v865 = vpack.c.b16 %v806, %v805
        %v866 = vpack.c.b16 %v808, %v807
        %v867 = vpack.c.b16 %v810, %v809
        %v868 = vpack.c.b16 %v812, %v811
        %v869 = vpack.c.b16 %v814, %v813
        %v870 = vpack.c.b16 %v816, %v815
        %v871 = vpack.c.b16 %v818, %v817
        %v872 = vpack.c.b16 %v820, %v819
        %v873 = vpack.c.b16 %v822, %v821
        %v874 = vpack.c.b16 %v824, %v823
        %v875 = vpack.c.b16 %v826, %v825
        %v876 = vpack.c.b16 %v828, %v827
        %v877 = vpack.c.b16 %v830, %v829
        %v878 = vpack.c.b16 %v832, %v831
        %v879 = vpack.c.b16 %v834, %v833
        %v880 = vpack.c.b16 %v836, %v835
        %v881 = vpack.c.b16 %v838, %v837
        %v882 = vpack.c.b16 %v840, %v839
        %v883 = vpack.c.b16 %v842, %v841
        %v884 = vpack.c.b16 %v844, %v843
        %v885 = vpack.c.b16 %v846, %v845
        %v886 = vpack.c.b16 %v848, %v847
        %v887 = vpack.c.b16 %v850, %v849
        %v888 = vpack.c.b16 %v852, %v851
        %v889 = vpack.c.b16 %v854, %v853
        %v890 = vpack.c.b16 %v856, %v855
        %v891 = vpack.c.b16 %v858, %v857
        %v892 = vpack.c.b16 %v860, %v859
        %925 = vmatpush.bf16.msra.mxu0 %v868
        %926 = vmatpush.bf16.msra.mxu0 %v867
        %927 = vmatpush.bf16.msra.mxu0 %v866
        %928 = vmatpush.bf16.msra.mxu0 %v865
        %929 = vmatpush.bf16.msra.mxu0 %v864
        %930 = vmatpush.bf16.msra.mxu0 %v863
        %931 = vmatpush.bf16.msra.mxu0 %v862
        %932 = vmatpush.bf16.msra.mxu0 %v861
        %933 = vmatmul.bf16.gmra.mxu0 %v701
        %v934 = vpop.f32.mrf.mxu0
        %v935 = vadd.f32 %v652, %v934
        %v936 = vpop.f32.mrf.mxu0
        %v937 = vadd.f32 %v652, %v936
        %938 = vmatmul.bf16.gmra.mxu0 %v705
        %v939 = vpop.f32.mrf.mxu0
        %v940 = vadd.f32 %v652, %v939
        %v941 = vpop.f32.mrf.mxu0
        %v942 = vadd.f32 %v652, %v941
        %943 = vmatmul.bf16.gmra.mxu0 %v709
        %v944 = vpop.f32.mrf.mxu0
        %v945 = vadd.f32 %v652, %v944
        %v946 = vpop.f32.mrf.mxu0
        %v947 = vadd.f32 %v652, %v946
        %948 = vmatmul.bf16.gmra.mxu0 %v713
        %v949 = vpop.f32.mrf.mxu0
        %v950 = vadd.f32 %v652, %v949
        %v951 = vpop.f32.mrf.mxu0
        %v952 = vadd.f32 %v652, %v951
        %953 = vdwg.mxu0
        %954 = vmatpush.bf16.msra.mxu0 %v876
        %955 = vmatpush.bf16.msra.mxu0 %v875
        %956 = vmatpush.bf16.msra.mxu0 %v874
        %957 = vmatpush.bf16.msra.mxu0 %v873
        %958 = vmatpush.bf16.msra.mxu0 %v872
        %959 = vmatpush.bf16.msra.mxu0 %v871
        %960 = vmatpush.bf16.msra.mxu0 %v870
        %961 = vmatpush.bf16.msra.mxu0 %v869
        %962 = vmatmul.bf16.gmra.mxu0 %v702
        %v963 = vpop.f32.mrf.mxu0
        %v964 = vadd.f32 %v935, %v963
        %v965 = vpop.f32.mrf.mxu0
        %v966 = vadd.f32 %v937, %v965
        %967 = vmatmul.bf16.gmra.mxu0 %v706
        %v968 = vpop.f32.mrf.mxu0
        %v969 = vadd.f32 %v940, %v968
        %v970 = vpop.f32.mrf.mxu0
        %v971 = vadd.f32 %v942, %v970
        %972 = vmatmul.bf16.gmra.mxu0 %v710
        %v973 = vpop.f32.mrf.mxu0
        %v974 = vadd.f32 %v945, %v973
        %v975 = vpop.f32.mrf.mxu0
        %v976 = vadd.f32 %v947, %v975
        %977 = vmatmul.bf16.gmra.mxu0 %v714
        %v978 = vpop.f32.mrf.mxu0
        %v979 = vadd.f32 %v950, %v978
        %v980 = vpop.f32.mrf.mxu0
        %v981 = vadd.f32 %v952, %v980
        %982 = vdwg.mxu0
        %983 = vmatpush.bf16.msra.mxu0 %v884
        %984 = vmatpush.bf16.msra.mxu0 %v883
        %985 = vmatpush.bf16.msra.mxu0 %v882
        %986 = vmatpush.bf16.msra.mxu0 %v881
        %987 = vmatpush.bf16.msra.mxu0 %v880
        %988 = vmatpush.bf16.msra.mxu0 %v879
        %989 = vmatpush.bf16.msra.mxu0 %v878
        %990 = vmatpush.bf16.msra.mxu0 %v877
        %991 = vmatmul.bf16.gmra.mxu0 %v703
        %v992 = vpop.f32.mrf.mxu0
        %v993 = vadd.f32 %v964, %v992
        %v994 = vpop.f32.mrf.mxu0
        %v995 = vadd.f32 %v966, %v994
        %996 = vmatmul.bf16.gmra.mxu0 %v707
        %v997 = vpop.f32.mrf.mxu0
        %v998 = vadd.f32 %v969, %v997
        %v999 = vpop.f32.mrf.mxu0
        %v1000 = vadd.f32 %v971, %v999
        %1001 = vmatmul.bf16.gmra.mxu0 %v711
        %v1002 = vpop.f32.mrf.mxu0
        %v1003 = vadd.f32 %v974, %v1002
        %v1004 = vpop.f32.mrf.mxu0
        %v1005 = vadd.f32 %v976, %v1004
        %1006 = vmatmul.bf16.gmra.mxu0 %v715
        %v1007 = vpop.f32.mrf.mxu0
        %v1008 = vadd.f32 %v979, %v1007
        %v1009 = vpop.f32.mrf.mxu0
        %v1010 = vadd.f32 %v981, %v1009
        %1011 = vdwg.mxu0
        %1012 = vmatpush.bf16.msra.mxu0 %v892
        %1013 = vmatpush.bf16.msra.mxu0 %v891
        %1014 = vmatpush.bf16.msra.mxu0 %v890
        %1015 = vmatpush.bf16.msra.mxu0 %v889
        %1016 = vmatpush.bf16.msra.mxu0 %v888
        %1017 = vmatpush.bf16.msra.mxu0 %v887
        %1018 = vmatpush.bf16.msra.mxu0 %v886
        %1019 = vmatpush.bf16.msra.mxu0 %v885
        %1020 = vmatmul.bf16.gmra.mxu0 %v704
        %v1021 = vpop.f32.mrf.mxu0
        %v1022 = vadd.f32 %v993, %v1021
        %v1023 = vpop.f32.mrf.mxu0
        %v1024 = vadd.f32 %v995, %v1023
        %1025 = vmatmul.bf16.gmra.mxu0 %v708
        %v1026 = vpop.f32.mrf.mxu0
        %v1027 = vadd.f32 %v998, %v1026
        %v1028 = vpop.f32.mrf.mxu0
        %v1029 = vadd.f32 %v1000, %v1028
        %1030 = vmatmul.bf16.gmra.mxu0 %v712
        %v1031 = vpop.f32.mrf.mxu0
        %v1032 = vadd.f32 %v1003, %v1031
        %v1033 = vpop.f32.mrf.mxu0
        %v1034 = vadd.f32 %v1005, %v1033
        %1035 = vmatmul.bf16.gmra.mxu0 %v716
        %v1036 = vpop.f32.mrf.mxu0
        %v1037 = vadd.f32 %v1008, %v1036
        %v1038 = vpop.f32.mrf.mxu0
        %v1039 = vadd.f32 %v1010, %v1038
        %1040 = vdwg.mxu0
        %v1041 = vld [vmem:[#allocation3] sm:$0xff]
        %v1042 = vld [vmem:[#allocation3 + $0x8] sm:$0xff]
        %vm1043 = vcmask 261120
        %v1045 = vsel %vm1043, %v1041, 0
        %v1048 = vsel %vm1043, %v1042, 0
        %v1051 = vsel %vm1043, %v1022, 0
        %v1054 = vsel %vm1043, %v1024, 0
        %v1057 = vsel %vm1043, %v1027, 0
        %v1060 = vsel %vm1043, %v1029, 0
        %v1063 = vsel %vm1043, %v1032, 0
        %v1066 = vsel %vm1043, %v1034, 0
        %v1069 = vsel %vm1043, %v1037, 0
        %v1072 = vsel %vm1043, %v1039, 0
        %1074 = vmatpush.xpose.msra.mxu0 0.0
        %1075 = vmatpush.xpose.msra.mxu0 0.0
        %1076 = vmatpush.xpose.msra.mxu0 0.0
        %1077 = vmatpush.xpose.msra.mxu0 0.0
        %1078 = vmatpush.xpose.msra.mxu0 0.0
        %1079 = vmatpush.xpose.msra.mxu0 0.0
        %1080 = vmatpush.xpose.msra.mxu0 0.0
        %1081 = vmatpush.xpose.msra.mxu0 0.0
        %1082 = vmatpush.xpose.msra.mxu0 %v1072
        %1083 = vmatpush.xpose.msra.mxu0 %v1069
        %1084 = vmatpush.xpose.msra.mxu0 %v1066
        %1085 = vmatpush.xpose.msra.mxu0 %v1063
        %1086 = vmatpush.xpose.msra.mxu0 %v1060
        %1087 = vmatpush.xpose.msra.mxu0 %v1057
        %1088 = vmatpush.xpose.msra.mxu0 %v1054
        %1089 = vmatpush.xpose.msra.mxu0 %v1051
        %1090 = vmatmul.f32.gmra.mxu0 %v1045
        %v1091 = vpop.f32.mrf.mxu0
        %v1092 = vadd.f32 0.0, %v1091
        %1093 = vmatmul.f32.gmra.mxu0 %v1048
        %v1094 = vpop.f32.mrf.mxu0
        %v1095 = vadd.f32 0.0, %v1094
        %1096 = vdwg.mxu0
        %vm1097 = vcmask 523264
        %v1098 = vsel %vm1097, %v1092, -inf
        %1099 = vmax.xlane.f32.xlu0 %v1098
        %v1100 = vpop.xlane.xlu0 %1099
        %v1101 = vsel %vm1097, %v1095, -inf
        %1102 = vmax.xlane.f32.xlu0 %v1101
        %v1103 = vpop.xlane.xlu0 %1102
        %v1104 = vsub.f32 %v1092, %v1100
        %v1105 = vsub.f32 %v1095, %v1103
        %v1106 = vmul.f32 %v1104, 1.442695
        %v1107 = vpow.pop %v1106
        %v1108 = vmul.f32 %v1105, 1.442695
        %v1109 = vpow.pop %v1108
        %v1110 = vsel %vm1097, %v1107, 0.0
        %1111 = vadd.xlane.f32.xlu0 %v1110
        %v1112 = vpop.xlane.xlu0 %1111
        %v1113 = vsel %vm1097, %v1109, 0.0
        %1114 = vadd.xlane.f32.xlu0 %v1113
        %v1115 = vpop.xlane.xlu0 %1114
        %v1116 = vrcp.pop %v1112
        %v1117 = vrcp.pop %v1115
        %v1118 = vmul.f32 %v1107, %v1116
        %v1119 = vmul.f32 %v1109, %v1117
        %v1121 = vsel %vm1097, %v1118, 0
        %v1124 = vsel %vm1097, %v1119, 0
        %1126 = vmatpush.msra.mxu0 0.0
        %1127 = vmatpush.msra.mxu0 0.0
        %1128 = vmatpush.msra.mxu0 0.0
        %1129 = vmatpush.msra.mxu0 0.0
        %1130 = vmatpush.msra.mxu0 0.0
        %1131 = vmatpush.msra.mxu0 0.0
        %1132 = vmatpush.msra.mxu0 0.0
        %1133 = vmatpush.msra.mxu0 0.0
        %1134 = vmatpush.msra.mxu0 %v1039
        %1135 = vmatpush.msra.mxu0 %v1037
        %1136 = vmatpush.msra.mxu0 %v1034
        %1137 = vmatpush.msra.mxu0 %v1032
        %1138 = vmatpush.msra.mxu0 %v1029
        %1139 = vmatpush.msra.mxu0 %v1027
        %1140 = vmatpush.msra.mxu0 %v1024
        %1141 = vmatpush.msra.mxu0 %v1022
        %1142 = vmatmul.f32.gmra.mxu0 %v1121
        %v1143 = vpop.f32.mrf.mxu0
        %v1144 = vadd.f32 0.0, %v1143
        %1145 = vmatmul.f32.gmra.mxu0 %v1124
        %v1146 = vpop.f32.mrf.mxu0
        %v1147 = vadd.f32 0.0, %v1146
        %1148 = vdwg.mxu0
        %1149 = vst.msk [vmem:[#allocation2] sm:$0xff] %vm1043, %v1144
        %1150 = vst.msk [vmem:[#allocation2 + $0x8] sm:$0xff] %vm1043, %v1147
        %1151 = vrot.lane.b32.xlu0 %v1041, 96
        %v1152 = vpop.permute.xlu0 %1151
        %1153 = vrot.lane.b32.xlu0 %v1042, 96
        %v1154 = vpop.permute.xlu0 %1153
        %1155 = vrot.lane.b32.xlu0 %v1022, 96
        %v1156 = vpop.permute.xlu0 %1155
        %1157 = vrot.lane.b32.xlu0 %v1024, 96
        %v1158 = vpop.permute.xlu0 %1157
        %1159 = vrot.lane.b32.xlu0 %v1027, 96
        %v1160 = vpop.permute.xlu0 %1159
        %1161 = vrot.lane.b32.xlu0 %v1029, 96
        %v1162 = vpop.permute.xlu0 %1161
        %1163 = vrot.lane.b32.xlu0 %v1032, 96
        %v1164 = vpop.permute.xlu0 %1163
        %1165 = vrot.lane.b32.xlu0 %v1034, 96
        %v1166 = vpop.permute.xlu0 %1165
        %1167 = vrot.lane.b32.xlu0 %v1037, 96
        %v1168 = vpop.permute.xlu0 %1167
        %1169 = vrot.lane.b32.xlu0 %v1039, 96
        %v1170 = vpop.permute.xlu0 %1169
        %v1171 = vsel %vm1043, %v1152, 0
        %v1173 = vsel %vm1043, %v1154, 0
        %v1175 = vsel %vm1043, %v1156, 0
        %v1177 = vsel %vm1043, %v1158, 0
        %v1179 = vsel %vm1043, %v1160, 0
        %v1181 = vsel %vm1043, %v1162, 0
        %v1183 = vsel %vm1043, %v1164, 0
        %v1185 = vsel %vm1043, %v1166, 0
        %v1187 = vsel %vm1043, %v1168, 0
        %v1189 = vsel %vm1043, %v1170, 0
        %1191 = vmatpush.xpose.msra.mxu0 0.0
        %1192 = vmatpush.xpose.msra.mxu0 0.0
        %1193 = vmatpush.xpose.msra.mxu0 0.0
        %1194 = vmatpush.xpose.msra.mxu0 0.0
        %1195 = vmatpush.xpose.msra.mxu0 0.0
        %1196 = vmatpush.xpose.msra.mxu0 0.0
        %1197 = vmatpush.xpose.msra.mxu0 0.0
        %1198 = vmatpush.xpose.msra.mxu0 0.0
        %1199 = vmatpush.xpose.msra.mxu0 %v1189
        %1200 = vmatpush.xpose.msra.mxu0 %v1187
        %1201 = vmatpush.xpose.msra.mxu0 %v1185
        %1202 = vmatpush.xpose.msra.mxu0 %v1183
        %1203 = vmatpush.xpose.msra.mxu0 %v1181
        %1204 = vmatpush.xpose.msra.mxu0 %v1179
        %1205 = vmatpush.xpose.msra.mxu0 %v1177
        %1206 = vmatpush.xpose.msra.mxu0 %v1175
        %1207 = vmatmul.f32.gmra.mxu0 %v1171
        %v1208 = vpop.f32.mrf.mxu0
        %v1209 = vadd.f32 0.0, %v1208
        %1210 = vmatmul.f32.gmra.mxu0 %v1173
        %v1211 = vpop.f32.mrf.mxu0
        %v1212 = vadd.f32 0.0, %v1211
        %1213 = vdwg.mxu0
        %v1214 = vsel %vm1097, %v1209, -inf
        %1215 = vmax.xlane.f32.xlu0 %v1214
        %v1216 = vpop.xlane.xlu0 %1215
        %v1217 = vsel %vm1097, %v1212, -inf
        %1218 = vmax.xlane.f32.xlu0 %v1217
        %v1219 = vpop.xlane.xlu0 %1218
        %v1220 = vsub.f32 %v1209, %v1216
        %v1221 = vsub.f32 %v1212, %v1219
        %v1222 = vmul.f32 %v1220, 1.442695
        %v1223 = vpow.pop %v1222
        %v1224 = vmul.f32 %v1221, 1.442695
        %v1225 = vpow.pop %v1224
        %v1226 = vsel %vm1097, %v1223, 0.0
        %1227 = vadd.xlane.f32.xlu0 %v1226
        %v1228 = vpop.xlane.xlu0 %1227
        %v1229 = vsel %vm1097, %v1225, 0.0
        %1230 = vadd.xlane.f32.xlu0 %v1229
        %v1231 = vpop.xlane.xlu0 %1230
        %v1232 = vrcp.pop %v1228
        %v1233 = vrcp.pop %v1231
        %v1234 = vmul.f32 %v1223, %v1232
        %v1235 = vmul.f32 %v1225, %v1233
        %v1245 = vsel %vm1097, %v1234, 0
        %v1248 = vsel %vm1097, %v1235, 0
        %1250 = vmatpush.msra.mxu0 0.0
        %1251 = vmatpush.msra.mxu0 0.0
        %1252 = vmatpush.msra.mxu0 0.0
        %1253 = vmatpush.msra.mxu0 0.0
        %1254 = vmatpush.msra.mxu0 0.0
        %1255 = vmatpush.msra.mxu0 0.0
        %1256 = vmatpush.msra.mxu0 0.0
        %1257 = vmatpush.msra.mxu0 0.0
        %1258 = vmatpush.msra.mxu0 %v1170
        %1259 = vmatpush.msra.mxu0 %v1168
        %1260 = vmatpush.msra.mxu0 %v1166
        %1261 = vmatpush.msra.mxu0 %v1164
        %1262 = vmatpush.msra.mxu0 %v1162
        %1263 = vmatpush.msra.mxu0 %v1160
        %1264 = vmatpush.msra.mxu0 %v1158
        %1265 = vmatpush.msra.mxu0 %v1156
        %1266 = vmatmul.f32.gmra.mxu0 %v1245
        %v1267 = vpop.f32.mrf.mxu0
        %v1268 = vadd.f32 0.0, %v1267
        %1269 = vmatmul.f32.gmra.mxu0 %v1248
        %v1270 = vpop.f32.mrf.mxu0
        %v1271 = vadd.f32 0.0, %v1270
        %1272 = vdwg.mxu0
        %1275 = vrot.lane.b32.xlu0 %v1268, 32
        %v1276 = vpop.permute.xlu0 %1275
        %1277 = vrot.lane.b32.xlu0 %v1271, 32
        %v1278 = vpop.permute.xlu0 %1277
        %vm1281 = vcmask 523520
        %1282 = vst.msk [vmem:[#allocation2] sm:$0xff] %vm1281, %v1276
        %1283 = vst.msk [vmem:[#allocation2 + $0x8] sm:$0xff] %vm1281, %v1278
        %v1284 = vld [vmem:[#allocation2] sm:$0xff]
        %v1285 = vld [vmem:[#allocation2 + $0x8] sm:$0xff]
        %v1286 = vadd.f32 %v1284, %v629
        %v1287 = vadd.f32 %v1285, %v632
        %1288 = vmatpush.msra.mxu0 %v527
        %1289 = vmatpush.msra.mxu0 %v526
        %1290 = vmatpush.msra.mxu0 %v525
        %1291 = vmatpush.msra.mxu0 %v524
        %1292 = vmatpush.msra.mxu0 %v523
        %1293 = vmatpush.msra.mxu0 %v522
        %1294 = vmatpush.msra.mxu0 %v521
        %1295 = vmatpush.msra.mxu0 %v520
        %1296 = vmatpush.msra.mxu0 %v519
        %1297 = vmatpush.msra.mxu0 %v518
        %1298 = vmatpush.msra.mxu0 %v517
        %1299 = vmatpush.msra.mxu0 %v516
        %1300 = vmatpush.msra.mxu0 %v515
        %1301 = vmatpush.msra.mxu0 %v514
        %1302 = vmatpush.msra.mxu0 %v513
        %1303 = vmatpush.msra.mxu0 %v512
        %1304 = vmatmul.f32.gmra.mxu0 %v1286
        %v1305 = vpop.f32.mrf.mxu0
        %v1306 = vadd.f32 0.0, %v1305
        %1307 = vmatmul.f32.gmra.mxu0 %v1287
        %v1308 = vpop.f32.mrf.mxu0
        %v1309 = vadd.f32 0.0, %v1308
        %1310 = vdwg.mxu0
        %v1311 = vsub.f32 %v1286, %v1306
        %v1312 = vsub.f32 %v1287, %v1309
        %v1313 = vmul.f32 %v1311, %v1311
        %v1314 = vmul.f32 %v1312, %v1312
        %1315 = vmatpush.msra.mxu0 %v527
        %1316 = vmatpush.msra.mxu0 %v526
        %1317 = vmatpush.msra.mxu0 %v525
        %1318 = vmatpush.msra.mxu0 %v524
        %1319 = vmatpush.msra.mxu0 %v523
        %1320 = vmatpush.msra.mxu0 %v522
        %1321 = vmatpush.msra.mxu0 %v521
        %1322 = vmatpush.msra.mxu0 %v520
        %1323 = vmatpush.msra.mxu0 %v519
        %1324 = vmatpush.msra.mxu0 %v518
        %1325 = vmatpush.msra.mxu0 %v517
        %1326 = vmatpush.msra.mxu0 %v516
        %1327 = vmatpush.msra.mxu0 %v515
        %1328 = vmatpush.msra.mxu0 %v514
        %1329 = vmatpush.msra.mxu0 %v513
        %1330 = vmatpush.msra.mxu0 %v512
        %1331 = vmatmul.f32.gmra.mxu0 %v1313
        %v1332 = vpop.f32.mrf.mxu0
        %v1333 = vadd.f32 1e-05, %v1332
        %1334 = vmatmul.f32.gmra.mxu0 %v1314
        %v1335 = vpop.f32.mrf.mxu0
        %v1336 = vadd.f32 1e-05, %v1335
        %1337 = vdwg.mxu0
        %v1338 = vrsqrt.pop %v1333
        %v1339 = vmul.f32 %v1338, %v1333
        %v1340 = vmul.f32 %v1339, %v1338
        %v1341 = vmul.f32 0.5, %v1340
        %v1342 = vsub.f32 1.5, %v1341
        %v1343 = vmul.f32 %v1338, %v1342
        %vm1344 = vweird.f32 %v1333
        %vm1345 = vweird.f32 %v1338
        %vm1346 = vmor %vm1344, %vm1345
        %v1347 = vsel %vm1346, %v1338, %v1343
        %v1348 = vrsqrt.pop %v1336
        %v1349 = vmul.f32 %v1348, %v1336
        %v1350 = vmul.f32 %v1349, %v1348
        %v1351 = vmul.f32 0.5, %v1350
        %v1352 = vsub.f32 1.5, %v1351
        %v1353 = vmul.f32 %v1348, %v1352
        %vm1354 = vweird.f32 %v1336
        %vm1355 = vweird.f32 %v1348
        %vm1356 = vmor %vm1354, %vm1355
        %v1357 = vsel %vm1356, %v1348, %v1353
        %v1358 = vmul.f32 %v1311, %v1347
        %v1359 = vmul.f32 %v1312, %v1357
        %v1360 = vperm.slane %v532, 2
        %v1361 = vmul.f32 %v1358, %v1360
        %v1362 = vmul.f32 %v1359, %v1360
        %v1363 = vperm.slane %v532, 3
        %v1364 = vadd.f32 %v1361, %v1363
        %v1365 = vadd.f32 %v1362, %v1363
        %v1366 = vld [vmem:[#allocation15] sm:$0xff]
        %v1367 = vld [vmem:[#allocation15 + $0x8] sm:$0xff]
        %v1368 = vld [vmem:[#allocation15 + $0x10] sm:$0xff]
        %v1369 = vld [vmem:[#allocation15 + $0x18] sm:$0xff]
        %v1370 = vld [vmem:[#allocation15 + $0x20] sm:$0xff]
        %v1371 = vld [vmem:[#allocation15 + $0x28] sm:$0xff]
        %v1372 = vld [vmem:[#allocation15 + $0x30] sm:$0xff]
        %v1373 = vld [vmem:[#allocation15 + $0x38] sm:$0xff]
        %v1374 = vld [vmem:[#allocation15 + $0x40] sm:$0xff]
        %v1375 = vld [vmem:[#allocation15 + $0x48] sm:$0xff]
        %v1376 = vld [vmem:[#allocation15 + $0x50] sm:$0xff]
        %v1377 = vld [vmem:[#allocation15 + $0x58] sm:$0xff]
        %v1378 = vld [vmem:[#allocation15 + $0x60] sm:$0xff]
        %v1379 = vld [vmem:[#allocation15 + $0x68] sm:$0xff]
        %v1380 = vld [vmem:[#allocation15 + $0x70] sm:$0xff]
        %v1381 = vld [vmem:[#allocation15 + $0x78] sm:$0xff]
        %v1382 = vperm.slane %v532, 4
        %1383 = vmatpush.msra.mxu0 %v1381
        %1384 = vmatpush.msra.mxu0 %v1380
        %1385 = vmatpush.msra.mxu0 %v1379
        %1386 = vmatpush.msra.mxu0 %v1378
        %1387 = vmatpush.msra.mxu0 %v1377
        %1388 = vmatpush.msra.mxu0 %v1376
        %1389 = vmatpush.msra.mxu0 %v1375
        %1390 = vmatpush.msra.mxu0 %v1374
        %1391 = vmatpush.msra.mxu0 %v1373
        %1392 = vmatpush.msra.mxu0 %v1372
        %1393 = vmatpush.msra.mxu0 %v1371
        %1394 = vmatpush.msra.mxu0 %v1370
        %1395 = vmatpush.msra.mxu0 %v1369
        %1396 = vmatpush.msra.mxu0 %v1368
        %1397 = vmatpush.msra.mxu0 %v1367
        %1398 = vmatpush.msra.mxu0 %v1366
        %1399 = vmatmul.f32.gmra.mxu0 %v1364
        %v1400 = vpop.f32.mrf.mxu0
        %v1401 = vadd.f32 %v1382, %v1400
        %1402 = vmatmul.f32.gmra.mxu0 %v1365
        %v1403 = vpop.f32.mrf.mxu0
        %v1404 = vadd.f32 %v1382, %v1403
        %1405 = vdwg.mxu0
        %v1406 = vmax.f32 %v1401, 0.0
        %v1407 = vmax.f32 %v1404, 0.0
        %v1408 = vld [vmem:[#allocation16] sm:$0xff]
        %v1409 = vld [vmem:[#allocation16 + $0x8] sm:$0xff]
        %v1410 = vld [vmem:[#allocation16 + $0x10] sm:$0xff]
        %v1411 = vld [vmem:[#allocation16 + $0x18] sm:$0xff]
        %v1412 = vld [vmem:[#allocation16 + $0x20] sm:$0xff]
        %v1413 = vld [vmem:[#allocation16 + $0x28] sm:$0xff]
        %v1414 = vld [vmem:[#allocation16 + $0x30] sm:$0xff]
        %v1415 = vld [vmem:[#allocation16 + $0x38] sm:$0xff]
        %v1416 = vld [vmem:[#allocation16 + $0x40] sm:$0xff]
        %v1417 = vld [vmem:[#allocation16 + $0x48] sm:$0xff]
        %v1418 = vld [vmem:[#allocation16 + $0x50] sm:$0xff]
        %v1419 = vld [vmem:[#allocation16 + $0x58] sm:$0xff]
        %v1420 = vld [vmem:[#allocation16 + $0x60] sm:$0xff]
        %v1421 = vld [vmem:[#allocation16 + $0x68] sm:$0xff]
        %v1422 = vld [vmem:[#allocation16 + $0x70] sm:$0xff]
        %v1423 = vld [vmem:[#allocation16 + $0x78] sm:$0xff]
        %1424 = vmatpush.msra.mxu0 %v1423
        %1425 = vmatpush.msra.mxu0 %v1422
        %1426 = vmatpush.msra.mxu0 %v1421
        %1427 = vmatpush.msra.mxu0 %v1420
        %1428 = vmatpush.msra.mxu0 %v1419
        %1429 = vmatpush.msra.mxu0 %v1418
        %1430 = vmatpush.msra.mxu0 %v1417
        %1431 = vmatpush.msra.mxu0 %v1416
        %1432 = vmatpush.msra.mxu0 %v1415
        %1433 = vmatpush.msra.mxu0 %v1414
        %1434 = vmatpush.msra.mxu0 %v1413
        %1435 = vmatpush.msra.mxu0 %v1412
        %1436 = vmatpush.msra.mxu0 %v1411
        %1437 = vmatpush.msra.mxu0 %v1410
        %1438 = vmatpush.msra.mxu0 %v1409
        %1439 = vmatpush.msra.mxu0 %v1408
        %1440 = vmatmul.f32.gmra.mxu0 %v1406
        %v1441 = vpop.f32.mrf.mxu0
        %v1442 = vadd.f32 0.0, %v1441
        %1443 = vmatmul.f32.gmra.mxu0 %v1407
        %v1444 = vpop.f32.mrf.mxu0
        %v1445 = vadd.f32 0.0, %v1444
        %1446 = vdwg.mxu0
        %v1447 = vadd.f32 %v1364, %v1442
        %v1448 = vadd.f32 %v1365, %v1445
        %v1449 = vperm.slane %v532, 5
        %v1450 = vadd.f32 %v1447, %v1449
        %v1451 = vadd.f32 %v1448, %v1449
        %1452 = vmatpush.msra.mxu0 %v527
        %1453 = vmatpush.msra.mxu0 %v526
        %1454 = vmatpush.msra.mxu0 %v525
        %1455 = vmatpush.msra.mxu0 %v524
        %1456 = vmatpush.msra.mxu0 %v523
        %1457 = vmatpush.msra.mxu0 %v522
        %1458 = vmatpush.msra.mxu0 %v521
        %1459 = vmatpush.msra.mxu0 %v520
        %1460 = vmatpush.msra.mxu0 %v519
        %1461 = vmatpush.msra.mxu0 %v518
        %1462 = vmatpush.msra.mxu0 %v517
        %1463 = vmatpush.msra.mxu0 %v516
        %1464 = vmatpush.msra.mxu0 %v515
        %1465 = vmatpush.msra.mxu0 %v514
        %1466 = vmatpush.msra.mxu0 %v513
        %1467 = vmatpush.msra.mxu0 %v512
        %1468 = vmatmul.f32.gmra.mxu0 %v1450
        %v1469 = vpop.f32.mrf.mxu0
        %v1470 = vadd.f32 0.0, %v1469
        %1471 = vmatmul.f32.gmra.mxu0 %v1451
        %v1472 = vpop.f32.mrf.mxu0
        %v1473 = vadd.f32 0.0, %v1472
        %1474 = vdwg.mxu0
        %v1475 = vsub.f32 %v1450, %v1470
        %v1476 = vsub.f32 %v1451, %v1473
        %v1477 = vmul.f32 %v1475, %v1475
        %v1478 = vmul.f32 %v1476, %v1476
        %1479 = vmatpush.msra.mxu0 %v527
        %1480 = vmatpush.msra.mxu0 %v526
        %1481 = vmatpush.msra.mxu0 %v525
        %1482 = vmatpush.msra.mxu0 %v524
        %1483 = vmatpush.msra.mxu0 %v523
        %1484 = vmatpush.msra.mxu0 %v522
        %1485 = vmatpush.msra.mxu0 %v521
        %1486 = vmatpush.msra.mxu0 %v520
        %1487 = vmatpush.msra.mxu0 %v519
        %1488 = vmatpush.msra.mxu0 %v518
        %1489 = vmatpush.msra.mxu0 %v517
        %1490 = vmatpush.msra.mxu0 %v516
        %1491 = vmatpush.msra.mxu0 %v515
        %1492 = vmatpush.msra.mxu0 %v514
        %1493 = vmatpush.msra.mxu0 %v513
        %1494 = vmatpush.msra.mxu0 %v512
        %1495 = vmatmul.f32.gmra.mxu0 %v1477
        %v1496 = vpop.f32.mrf.mxu0
        %v1497 = vadd.f32 1e-05, %v1496
        %1498 = vmatmul.f32.gmra.mxu0 %v1478
        %v1499 = vpop.f32.mrf.mxu0
        %v1500 = vadd.f32 1e-05, %v1499
        %1501 = vdwg.mxu0
        %v1502 = vrsqrt.pop %v1497
        %v1503 = vmul.f32 %v1502, %v1497
        %v1504 = vmul.f32 %v1503, %v1502
        %v1505 = vmul.f32 0.5, %v1504
        %v1506 = vsub.f32 1.5, %v1505
        %v1507 = vmul.f32 %v1502, %v1506
        %vm1508 = vweird.f32 %v1497
        %vm1509 = vweird.f32 %v1502
        %vm1510 = vmor %vm1508, %vm1509
        %v1511 = vsel %vm1510, %v1502, %v1507
        %v1512 = vrsqrt.pop %v1500
        %v1513 = vmul.f32 %v1512, %v1500
        %v1514 = vmul.f32 %v1513, %v1512
        %v1515 = vmul.f32 0.5, %v1514
        %v1516 = vsub.f32 1.5, %v1515
        %v1517 = vmul.f32 %v1512, %v1516
        %vm1518 = vweird.f32 %v1500
        %vm1519 = vweird.f32 %v1512
        %vm1520 = vmor %vm1518, %vm1519
        %v1521 = vsel %vm1520, %v1512, %v1517
        %v1522 = vmul.f32 %v1475, %v1511
        %v1523 = vmul.f32 %v1476, %v1521
        %v1524 = vperm.slane %v532, 6
        %v1525 = vmul.f32 %v1522, %v1524
        %v1526 = vmul.f32 %v1523, %v1524
        %v1527 = vperm.slane %v532, 7
        %v1528 = vadd.f32 %v1525, %v1527
        %v1529 = vadd.f32 %v1526, %v1527
        %s1530 = scalar_lea.vmem [#allocation13], 8
        %v1531 = vld [vmem:[%s1530] sm:$0xff]
        %s1532 = scalar_lea.vmem [#allocation9], 256
        %v1533 = vld [vmem:[%s1532] sm:$0xf]
        %v1534 = vld [vmem:[%s1532 + $0x4] sm:$0xf]
        %v1535 = vld [vmem:[%s1532 + $0x8] sm:$0xf]
        %v1536 = vld [vmem:[%s1532 + $0xc] sm:$0xf]
        %v1537 = vld [vmem:[%s1532 + $0x10] sm:$0xf]
        %v1538 = vld [vmem:[%s1532 + $0x14] sm:$0xf]
        %v1539 = vld [vmem:[%s1532 + $0x18] sm:$0xf]
        %v1540 = vld [vmem:[%s1532 + $0x1c] sm:$0xf]
        %v1541 = vld [vmem:[%s1532 + $0x20] sm:$0xf]
        %v1542 = vld [vmem:[%s1532 + $0x24] sm:$0xf]
        %v1543 = vld [vmem:[%s1532 + $0x28] sm:$0xf]
        %v1544 = vld [vmem:[%s1532 + $0x2c] sm:$0xf]
        %v1545 = vld [vmem:[%s1532 + $0x30] sm:$0xf]
        %v1546 = vld [vmem:[%s1532 + $0x34] sm:$0xf]
        %v1547 = vld [vmem:[%s1532 + $0x38] sm:$0xf]
        %v1548 = vld [vmem:[%s1532 + $0x3c] sm:$0xf]
        %v1549 = vld [vmem:[%s1532 + $0x40] sm:$0xf]
        %v1550 = vld [vmem:[%s1532 + $0x44] sm:$0xf]
        %v1551 = vld [vmem:[%s1532 + $0x48] sm:$0xf]
        %v1552 = vld [vmem:[%s1532 + $0x4c] sm:$0xf]
        %v1553 = vld [vmem:[%s1532 + $0x50] sm:$0xf]
        %v1554 = vld [vmem:[%s1532 + $0x54] sm:$0xf]
        %v1555 = vld [vmem:[%s1532 + $0x58] sm:$0xf]
        %v1556 = vld [vmem:[%s1532 + $0x5c] sm:$0xf]
        %v1557 = vld [vmem:[%s1532 + $0x60] sm:$0xf]
        %v1558 = vld [vmem:[%s1532 + $0x64] sm:$0xf]
        %v1559 = vld [vmem:[%s1532 + $0x68] sm:$0xf]
        %v1560 = vld [vmem:[%s1532 + $0x6c] sm:$0xf]
        %v1561 = vld [vmem:[%s1532 + $0x70] sm:$0xf]
        %v1562 = vld [vmem:[%s1532 + $0x74] sm:$0xf]
        %v1563 = vld [vmem:[%s1532 + $0x78] sm:$0xf]
        %v1564 = vld [vmem:[%s1532 + $0x7c] sm:$0xf]
        %v1565 = vld [vmem:[%s1532 + $0x80] sm:$0xf]
        %v1566 = vld [vmem:[%s1532 + $0x84] sm:$0xf]
        %v1567 = vld [vmem:[%s1532 + $0x88] sm:$0xf]
        %v1568 = vld [vmem:[%s1532 + $0x8c] sm:$0xf]
        %v1569 = vld [vmem:[%s1532 + $0x90] sm:$0xf]
        %v1570 = vld [vmem:[%s1532 + $0x94] sm:$0xf]
        %v1571 = vld [vmem:[%s1532 + $0x98] sm:$0xf]
        %v1572 = vld [vmem:[%s1532 + $0x9c] sm:$0xf]
        %v1573 = vld [vmem:[%s1532 + $0xa0] sm:$0xf]
        %v1574 = vld [vmem:[%s1532 + $0xa4] sm:$0xf]
        %v1575 = vld [vmem:[%s1532 + $0xa8] sm:$0xf]
        %v1576 = vld [vmem:[%s1532 + $0xac] sm:$0xf]
        %v1577 = vld [vmem:[%s1532 + $0xb0] sm:$0xf]
        %v1578 = vld [vmem:[%s1532 + $0xb4] sm:$0xf]
        %v1579 = vld [vmem:[%s1532 + $0xb8] sm:$0xf]
        %v1580 = vld [vmem:[%s1532 + $0xbc] sm:$0xf]
        %v1581 = vld [vmem:[%s1532 + $0xc0] sm:$0xf]
        %v1582 = vld [vmem:[%s1532 + $0xc4] sm:$0xf]
        %v1583 = vld [vmem:[%s1532 + $0xc8] sm:$0xf]
        %v1584 = vld [vmem:[%s1532 + $0xcc] sm:$0xf]
        %v1585 = vld [vmem:[%s1532 + $0xd0] sm:$0xf]
        %v1586 = vld [vmem:[%s1532 + $0xd4] sm:$0xf]
        %v1587 = vld [vmem:[%s1532 + $0xd8] sm:$0xf]
        %v1588 = vld [vmem:[%s1532 + $0xdc] sm:$0xf]
        %v1589 = vld [vmem:[%s1532 + $0xe0] sm:$0xf]
        %v1590 = vld [vmem:[%s1532 + $0xe4] sm:$0xf]
        %v1591 = vld [vmem:[%s1532 + $0xe8] sm:$0xf]
        %v1592 = vld [vmem:[%s1532 + $0xec] sm:$0xf]
        %v1593 = vld [vmem:[%s1532 + $0xf0] sm:$0xf]
        %v1594 = vld [vmem:[%s1532 + $0xf4] sm:$0xf]
        %v1595 = vld [vmem:[%s1532 + $0xf8] sm:$0xf]
        %v1596 = vld [vmem:[%s1532 + $0xfc] sm:$0xf]
        %v1597 = vld [vmem:[#allocation12] sm:$0xff]
        %v1598 = vld [vmem:[#allocation12 + $0x8] sm:$0xff]
        %v1599 = vld [vmem:[#allocation12 + $0x10] sm:$0xff]
        %v1600 = vld [vmem:[#allocation12 + $0x18] sm:$0xff]
        %v1601 = vld [vmem:[#allocation12 + $0x20] sm:$0xff]
        %v1602 = vld [vmem:[#allocation12 + $0x28] sm:$0xff]
        %v1603 = vld [vmem:[#allocation12 + $0x30] sm:$0xff]
        %v1604 = vld [vmem:[#allocation12 + $0x38] sm:$0xff]
        %v1605 = vld [vmem:[#allocation12 + $0x40] sm:$0xff]
        %v1606 = vld [vmem:[#allocation12 + $0x48] sm:$0xff]
        %v1607 = vld [vmem:[#allocation12 + $0x50] sm:$0xff]
        %v1608 = vld [vmem:[#allocation12 + $0x58] sm:$0xff]
        %v1609 = vld [vmem:[#allocation12 + $0x60] sm:$0xff]
        %v1610 = vld [vmem:[#allocation12 + $0x68] sm:$0xff]
        %v1611 = vld [vmem:[#allocation12 + $0x70] sm:$0xff]
        %v1612 = vld [vmem:[#allocation12 + $0x78] sm:$0xff]
        %v1613 = vperm.slane %v1531, 1
        %1614 = vmatpush.msra.mxu0 %v1612
        %1615 = vmatpush.msra.mxu0 %v1611
        %1616 = vmatpush.msra.mxu0 %v1610
        %1617 = vmatpush.msra.mxu0 %v1609
        %1618 = vmatpush.msra.mxu0 %v1608
        %1619 = vmatpush.msra.mxu0 %v1607
        %1620 = vmatpush.msra.mxu0 %v1606
        %1621 = vmatpush.msra.mxu0 %v1605
        %1622 = vmatpush.msra.mxu0 %v1604
        %1623 = vmatpush.msra.mxu0 %v1603
        %1624 = vmatpush.msra.mxu0 %v1602
        %1625 = vmatpush.msra.mxu0 %v1601
        %1626 = vmatpush.msra.mxu0 %v1600
        %1627 = vmatpush.msra.mxu0 %v1599
        %1628 = vmatpush.msra.mxu0 %v1598
        %1629 = vmatpush.msra.mxu0 %v1597
        %1630 = vmatmul.f32.gmra.mxu0 %v1528
        %v1631 = vpop.f32.mrf.mxu0
        %v1632 = vadd.f32 %v1613, %v1631
        %1633 = vmatmul.f32.gmra.mxu0 %v1529
        %v1634 = vpop.f32.mrf.mxu0
        %v1635 = vadd.f32 %v1613, %v1634
        %1636 = vdwg.mxu0
        %1637 = vst [vmem:[#allocation3] sm:$0xff] %v1632
        %1638 = vst [vmem:[#allocation3 + $0x8] sm:$0xff] %v1635
        %v1639 = vld [vmem:[%s434] sm:$0xff]
        %v1640 = vld [vmem:[%s434 + $0x8] sm:$0xff]
        %v1641 = vld [vmem:[%s434 + $0x10] sm:$0xff]
        %v1642 = vld [vmem:[%s434 + $0x18] sm:$0xff]
        %v1643 = vld [vmem:[%s434 + $0x20] sm:$0xff]
        %v1644 = vld [vmem:[%s434 + $0x28] sm:$0xff]
        %v1645 = vld [vmem:[%s434 + $0x30] sm:$0xff]
        %v1646 = vld [vmem:[%s434 + $0x38] sm:$0xff]
        %v1647 = vld [vmem:[%s434 + $0x40] sm:$0xff]
        %v1648 = vld [vmem:[%s434 + $0x48] sm:$0xff]
        %v1649 = vld [vmem:[%s434 + $0x50] sm:$0xff]
        %v1650 = vld [vmem:[%s434 + $0x58] sm:$0xff]
        %v1651 = vld [vmem:[%s434 + $0x60] sm:$0xff]
        %v1652 = vld [vmem:[%s434 + $0x68] sm:$0xff]
        %v1653 = vld [vmem:[%s434 + $0x70] sm:$0xff]
        %v1654 = vld [vmem:[%s434 + $0x78] sm:$0xff]
        %v1655 = vperm.slane %v1531, 0
        %v1672 = vunpack.c.l.b16 %v1639
        %v1673 = vunpack.c.h.b16 %v1639
        %v1674 = vunpack.c.l.b16 %v1640
        %v1675 = vunpack.c.h.b16 %v1640
        %v1676 = vunpack.c.l.b16 %v1641
        %v1677 = vunpack.c.h.b16 %v1641
        %v1678 = vunpack.c.l.b16 %v1642
        %v1679 = vunpack.c.h.b16 %v1642
        %v1680 = vunpack.c.l.b16 %v1643
        %v1681 = vunpack.c.h.b16 %v1643
        %v1682 = vunpack.c.l.b16 %v1644
        %v1683 = vunpack.c.h.b16 %v1644
        %v1684 = vunpack.c.l.b16 %v1645
        %v1685 = vunpack.c.h.b16 %v1645
        %v1686 = vunpack.c.l.b16 %v1646
        %v1687 = vunpack.c.h.b16 %v1646
        %v1688 = vunpack.c.l.b16 %v1647
        %v1689 = vunpack.c.h.b16 %v1647
        %v1690 = vunpack.c.l.b16 %v1648
        %v1691 = vunpack.c.h.b16 %v1648
        %v1692 = vunpack.c.l.b16 %v1649
        %v1693 = vunpack.c.h.b16 %v1649
        %v1694 = vunpack.c.l.b16 %v1650
        %v1695 = vunpack.c.h.b16 %v1650
        %v1696 = vunpack.c.l.b16 %v1651
        %v1697 = vunpack.c.h.b16 %v1651
        %v1698 = vunpack.c.l.b16 %v1652
        %v1699 = vunpack.c.h.b16 %v1652
        %v1700 = vunpack.c.l.b16 %v1653
        %v1701 = vunpack.c.h.b16 %v1653
        %v1702 = vunpack.c.l.b16 %v1654
        %v1703 = vunpack.c.h.b16 %v1654
        %v1704 = vpack.c.b16 %v1676, %v1672
        %v1705 = vpack.c.b16 %v1677, %v1673
        %v1706 = vpack.c.b16 %v1678, %v1674
        %v1707 = vpack.c.b16 %v1679, %v1675
        %v1708 = vpack.c.b16 %v1684, %v1680
        %v1709 = vpack.c.b16 %v1685, %v1681
        %v1710 = vpack.c.b16 %v1686, %v1682
        %v1711 = vpack.c.b16 %v1687, %v1683
        %v1712 = vpack.c.b16 %v1692, %v1688
        %v1713 = vpack.c.b16 %v1693, %v1689
        %v1714 = vpack.c.b16 %v1694, %v1690
        %v1715 = vpack.c.b16 %v1695, %v1691
        %v1716 = vpack.c.b16 %v1700, %v1696
        %v1717 = vpack.c.b16 %v1701, %v1697
        %v1718 = vpack.c.b16 %v1702, %v1698
        %v1719 = vpack.c.b16 %v1703, %v1699
        %v1800 = vunpack.c.l.b16 %v1533
        %v1801 = vunpack.c.l.b16 %v1534
        %v1802 = vunpack.c.l.b16 %v1535
        %v1803 = vunpack.c.l.b16 %v1536
        %v1804 = vunpack.c.l.b16 %v1537
        %v1805 = vunpack.c.l.b16 %v1538
        %v1806 = vunpack.c.l.b16 %v1539
        %v1807 = vunpack.c.l.b16 %v1540
        %v1808 = vunpack.c.l.b16 %v1541
        %v1809 = vunpack.c.l.b16 %v1542
        %v1810 = vunpack.c.l.b16 %v1543
        %v1811 = vunpack.c.l.b16 %v1544
        %v1812 = vunpack.c.l.b16 %v1545
        %v1813 = vunpack.c.l.b16 %v1546
        %v1814 = vunpack.c.l.b16 %v1547
        %v1815 = vunpack.c.l.b16 %v1548
        %v1816 = vunpack.c.l.b16 %v1549
        %v1817 = vunpack.c.l.b16 %v1550
        %v1818 = vunpack.c.l.b16 %v1551
        %v1819 = vunpack.c.l.b16 %v1552
        %v1820 = vunpack.c.l.b16 %v1553
        %v1821 = vunpack.c.l.b16 %v1554
        %v1822 = vunpack.c.l.b16 %v1555
        %v1823 = vunpack.c.l.b16 %v1556
        %v1824 = vunpack.c.l.b16 %v1557
        %v1825 = vunpack.c.l.b16 %v1558
        %v1826 = vunpack.c.l.b16 %v1559
        %v1827 = vunpack.c.l.b16 %v1560
        %v1828 = vunpack.c.l.b16 %v1561
        %v1829 = vunpack.c.l.b16 %v1562
        %v1830 = vunpack.c.l.b16 %v1563
        %v1831 = vunpack.c.l.b16 %v1564
        %v1832 = vunpack.c.l.b16 %v1565
        %v1833 = vunpack.c.l.b16 %v1566
        %v1834 = vunpack.c.l.b16 %v1567
        %v1835 = vunpack.c.l.b16 %v1568
        %v1836 = vunpack.c.l.b16 %v1569
        %v1837 = vunpack.c.l.b16 %v1570
        %v1838 = vunpack.c.l.b16 %v1571
        %v1839 = vunpack.c.l.b16 %v1572
        %v1840 = vunpack.c.l.b16 %v1573
        %v1841 = vunpack.c.l.b16 %v1574
        %v1842 = vunpack.c.l.b16 %v1575
        %v1843 = vunpack.c.l.b16 %v1576
        %v1844 = vunpack.c.l.b16 %v1577
        %v1845 = vunpack.c.l.b16 %v1578
        %v1846 = vunpack.c.l.b16 %v1579
        %v1847 = vunpack.c.l.b16 %v1580
        %v1848 = vunpack.c.l.b16 %v1581
        %v1849 = vunpack.c.l.b16 %v1582
        %v1850 = vunpack.c.l.b16 %v1583
        %v1851 = vunpack.c.l.b16 %v1584
        %v1852 = vunpack.c.l.b16 %v1585
        %v1853 = vunpack.c.l.b16 %v1586
        %v1854 = vunpack.c.l.b16 %v1587
        %v1855 = vunpack.c.l.b16 %v1588
        %v1856 = vunpack.c.l.b16 %v1589
        %v1857 = vunpack.c.l.b16 %v1590
        %v1858 = vunpack.c.l.b16 %v1591
        %v1859 = vunpack.c.l.b16 %v1592
        %v1860 = vunpack.c.l.b16 %v1593
        %v1861 = vunpack.c.l.b16 %v1594
        %v1862 = vunpack.c.l.b16 %v1595
        %v1863 = vunpack.c.l.b16 %v1596
        %v1864 = vpack.c.b16 %v1801, %v1800
        %v1865 = vpack.c.b16 %v1803, %v1802
        %v1866 = vpack.c.b16 %v1805, %v1804
        %v1867 = vpack.c.b16 %v1807, %v1806
        %v1868 = vpack.c.b16 %v1809, %v1808
        %v1869 = vpack.c.b16 %v1811, %v1810
        %v1870 = vpack.c.b16 %v1813, %v1812
        %v1871 = vpack.c.b16 %v1815, %v1814
        %v1872 = vpack.c.b16 %v1817, %v1816
        %v1873 = vpack.c.b16 %v1819, %v1818
        %v1874 = vpack.c.b16 %v1821, %v1820
        %v1875 = vpack.c.b16 %v1823, %v1822
        %v1876 = vpack.c.b16 %v1825, %v1824
        %v1877 = vpack.c.b16 %v1827, %v1826
        %v1878 = vpack.c.b16 %v1829, %v1828
        %v1879 = vpack.c.b16 %v1831, %v1830
        %v1880 = vpack.c.b16 %v1833, %v1832
        %v1881 = vpack.c.b16 %v1835, %v1834
        %v1882 = vpack.c.b16 %v1837, %v1836
        %v1883 = vpack.c.b16 %v1839, %v1838
        %v1884 = vpack.c.b16 %v1841, %v1840
        %v1885 = vpack.c.b16 %v1843, %v1842
        %v1886 = vpack.c.b16 %v1845, %v1844
        %v1887 = vpack.c.b16 %v1847, %v1846
        %v1888 = vpack.c.b16 %v1849, %v1848
        %v1889 = vpack.c.b16 %v1851, %v1850
        %v1890 = vpack.c.b16 %v1853, %v1852
        %v1891 = vpack.c.b16 %v1855, %v1854
        %v1892 = vpack.c.b16 %v1857, %v1856
        %v1893 = vpack.c.b16 %v1859, %v1858
        %v1894 = vpack.c.b16 %v1861, %v1860
        %v1895 = vpack.c.b16 %v1863, %v1862
        %1928 = vmatpush.bf16.msra.mxu0 %v1871
        %1929 = vmatpush.bf16.msra.mxu0 %v1870
        %1930 = vmatpush.bf16.msra.mxu0 %v1869
        %1931 = vmatpush.bf16.msra.mxu0 %v1868
        %1932 = vmatpush.bf16.msra.mxu0 %v1867
        %1933 = vmatpush.bf16.msra.mxu0 %v1866
        %1934 = vmatpush.bf16.msra.mxu0 %v1865
        %1935 = vmatpush.bf16.msra.mxu0 %v1864
        %1936 = vmatmul.bf16.gmra.mxu0 %v1704
        %v1937 = vpop.f32.mrf.mxu0
        %v1938 = vadd.f32 %v1655, %v1937
        %v1939 = vpop.f32.mrf.mxu0
        %v1940 = vadd.f32 %v1655, %v1939
        %1941 = vmatmul.bf16.gmra.mxu0 %v1708
        %v1942 = vpop.f32.mrf.mxu0
        %v1943 = vadd.f32 %v1655, %v1942
        %v1944 = vpop.f32.mrf.mxu0
        %v1945 = vadd.f32 %v1655, %v1944
        %1946 = vmatmul.bf16.gmra.mxu0 %v1712
        %v1947 = vpop.f32.mrf.mxu0
        %v1948 = vadd.f32 %v1655, %v1947
        %v1949 = vpop.f32.mrf.mxu0
        %v1950 = vadd.f32 %v1655, %v1949
        %1951 = vmatmul.bf16.gmra.mxu0 %v1716
        %v1952 = vpop.f32.mrf.mxu0
        %v1953 = vadd.f32 %v1655, %v1952
        %v1954 = vpop.f32.mrf.mxu0
        %v1955 = vadd.f32 %v1655, %v1954
        %1956 = vdwg.mxu0
        %1957 = vmatpush.bf16.msra.mxu0 %v1879
        %1958 = vmatpush.bf16.msra.mxu0 %v1878
        %1959 = vmatpush.bf16.msra.mxu0 %v1877
        %1960 = vmatpush.bf16.msra.mxu0 %v1876
        %1961 = vmatpush.bf16.msra.mxu0 %v1875
        %1962 = vmatpush.bf16.msra.mxu0 %v1874
        %1963 = vmatpush.bf16.msra.mxu0 %v1873
        %1964 = vmatpush.bf16.msra.mxu0 %v1872
        %1965 = vmatmul.bf16.gmra.mxu0 %v1705
        %v1966 = vpop.f32.mrf.mxu0
        %v1967 = vadd.f32 %v1938, %v1966
        %v1968 = vpop.f32.mrf.mxu0
        %v1969 = vadd.f32 %v1940, %v1968
        %1970 = vmatmul.bf16.gmra.mxu0 %v1709
        %v1971 = vpop.f32.mrf.mxu0
        %v1972 = vadd.f32 %v1943, %v1971
        %v1973 = vpop.f32.mrf.mxu0
        %v1974 = vadd.f32 %v1945, %v1973
        %1975 = vmatmul.bf16.gmra.mxu0 %v1713
        %v1976 = vpop.f32.mrf.mxu0
        %v1977 = vadd.f32 %v1948, %v1976
        %v1978 = vpop.f32.mrf.mxu0
        %v1979 = vadd.f32 %v1950, %v1978
        %1980 = vmatmul.bf16.gmra.mxu0 %v1717
        %v1981 = vpop.f32.mrf.mxu0
        %v1982 = vadd.f32 %v1953, %v1981
        %v1983 = vpop.f32.mrf.mxu0
        %v1984 = vadd.f32 %v1955, %v1983
        %1985 = vdwg.mxu0
        %1986 = vmatpush.bf16.msra.mxu0 %v1887
        %1987 = vmatpush.bf16.msra.mxu0 %v1886
        %1988 = vmatpush.bf16.msra.mxu0 %v1885
        %1989 = vmatpush.bf16.msra.mxu0 %v1884
        %1990 = vmatpush.bf16.msra.mxu0 %v1883
        %1991 = vmatpush.bf16.msra.mxu0 %v1882
        %1992 = vmatpush.bf16.msra.mxu0 %v1881
        %1993 = vmatpush.bf16.msra.mxu0 %v1880
        %1994 = vmatmul.bf16.gmra.mxu0 %v1706
        %v1995 = vpop.f32.mrf.mxu0
        %v1996 = vadd.f32 %v1967, %v1995
        %v1997 = vpop.f32.mrf.mxu0
        %v1998 = vadd.f32 %v1969, %v1997
        %1999 = vmatmul.bf16.gmra.mxu0 %v1710
        %v2000 = vpop.f32.mrf.mxu0
        %v2001 = vadd.f32 %v1972, %v2000
        %v2002 = vpop.f32.mrf.mxu0
        %v2003 = vadd.f32 %v1974, %v2002
        %2004 = vmatmul.bf16.gmra.mxu0 %v1714
        %v2005 = vpop.f32.mrf.mxu0
        %v2006 = vadd.f32 %v1977, %v2005
        %v2007 = vpop.f32.mrf.mxu0
        %v2008 = vadd.f32 %v1979, %v2007
        %2009 = vmatmul.bf16.gmra.mxu0 %v1718
        %v2010 = vpop.f32.mrf.mxu0
        %v2011 = vadd.f32 %v1982, %v2010
        %v2012 = vpop.f32.mrf.mxu0
        %v2013 = vadd.f32 %v1984, %v2012
        %2014 = vdwg.mxu0
        %2015 = vmatpush.bf16.msra.mxu0 %v1895
        %2016 = vmatpush.bf16.msra.mxu0 %v1894
        %2017 = vmatpush.bf16.msra.mxu0 %v1893
        %2018 = vmatpush.bf16.msra.mxu0 %v1892
        %2019 = vmatpush.bf16.msra.mxu0 %v1891
        %2020 = vmatpush.bf16.msra.mxu0 %v1890
        %2021 = vmatpush.bf16.msra.mxu0 %v1889
        %2022 = vmatpush.bf16.msra.mxu0 %v1888
        %2023 = vmatmul.bf16.gmra.mxu0 %v1707
        %v2024 = vpop.f32.mrf.mxu0
        %v2025 = vadd.f32 %v1996, %v2024
        %v2026 = vpop.f32.mrf.mxu0
        %v2027 = vadd.f32 %v1998, %v2026
        %2028 = vmatmul.bf16.gmra.mxu0 %v1711
        %v2029 = vpop.f32.mrf.mxu0
        %v2030 = vadd.f32 %v2001, %v2029
        %v2031 = vpop.f32.mrf.mxu0
        %v2032 = vadd.f32 %v2003, %v2031
        %2033 = vmatmul.bf16.gmra.mxu0 %v1715
        %v2034 = vpop.f32.mrf.mxu0
        %v2035 = vadd.f32 %v2006, %v2034
        %v2036 = vpop.f32.mrf.mxu0
        %v2037 = vadd.f32 %v2008, %v2036
        %2038 = vmatmul.bf16.gmra.mxu0 %v1719
        %v2039 = vpop.f32.mrf.mxu0
        %v2040 = vadd.f32 %v2011, %v2039
        %v2041 = vpop.f32.mrf.mxu0
        %v2042 = vadd.f32 %v2013, %v2041
        %2043 = vdwg.mxu0
        %v2044 = vld [vmem:[#allocation3] sm:$0xff]
        %v2045 = vld [vmem:[#allocation3 + $0x8] sm:$0xff]
        %v2047 = vsel %vm1043, %v2044, 0
        %v2050 = vsel %vm1043, %v2045, 0
        %v2053 = vsel %vm1043, %v2025, 0
        %v2056 = vsel %vm1043, %v2027, 0
        %v2059 = vsel %vm1043, %v2030, 0
        %v2062 = vsel %vm1043, %v2032, 0
        %v2065 = vsel %vm1043, %v2035, 0
        %v2068 = vsel %vm1043, %v2037, 0
        %v2071 = vsel %vm1043, %v2040, 0
        %v2074 = vsel %vm1043, %v2042, 0
        %2076 = vmatpush.xpose.msra.mxu0 0.0
        %2077 = vmatpush.xpose.msra.mxu0 0.0
        %2078 = vmatpush.xpose.msra.mxu0 0.0
        %2079 = vmatpush.xpose.msra.mxu0 0.0
        %2080 = vmatpush.xpose.msra.mxu0 0.0
        %2081 = vmatpush.xpose.msra.mxu0 0.0
        %2082 = vmatpush.xpose.msra.mxu0 0.0
        %2083 = vmatpush.xpose.msra.mxu0 0.0
        %2084 = vmatpush.xpose.msra.mxu0 %v2074
        %2085 = vmatpush.xpose.msra.mxu0 %v2071
        %2086 = vmatpush.xpose.msra.mxu0 %v2068
        %2087 = vmatpush.xpose.msra.mxu0 %v2065
        %2088 = vmatpush.xpose.msra.mxu0 %v2062
        %2089 = vmatpush.xpose.msra.mxu0 %v2059
        %2090 = vmatpush.xpose.msra.mxu0 %v2056
        %2091 = vmatpush.xpose.msra.mxu0 %v2053
        %2092 = vmatmul.f32.gmra.mxu0 %v2047
        %v2093 = vpop.f32.mrf.mxu0
        %v2094 = vadd.f32 0.0, %v2093
        %2095 = vmatmul.f32.gmra.mxu0 %v2050
        %v2096 = vpop.f32.mrf.mxu0
        %v2097 = vadd.f32 0.0, %v2096
        %2098 = vdwg.mxu0
        %v2099 = vsel %vm1097, %v2094, -inf
        %2100 = vmax.xlane.f32.xlu0 %v2099
        %v2101 = vpop.xlane.xlu0 %2100
        %v2102 = vsel %vm1097, %v2097, -inf
        %2103 = vmax.xlane.f32.xlu0 %v2102
        %v2104 = vpop.xlane.xlu0 %2103
        %v2105 = vsub.f32 %v2094, %v2101
        %v2106 = vsub.f32 %v2097, %v2104
        %v2107 = vmul.f32 %v2105, 1.442695
        %v2108 = vpow.pop %v2107
        %v2109 = vmul.f32 %v2106, 1.442695
        %v2110 = vpow.pop %v2109
        %v2111 = vsel %vm1097, %v2108, 0.0
        %2112 = vadd.xlane.f32.xlu0 %v2111
        %v2113 = vpop.xlane.xlu0 %2112
        %v2114 = vsel %vm1097, %v2110, 0.0
        %2115 = vadd.xlane.f32.xlu0 %v2114
        %v2116 = vpop.xlane.xlu0 %2115
        %v2117 = vrcp.pop %v2113
        %v2118 = vrcp.pop %v2116
        %v2119 = vmul.f32 %v2108, %v2117
        %v2120 = vmul.f32 %v2110, %v2118
        %v2122 = vsel %vm1097, %v2119, 0
        %v2125 = vsel %vm1097, %v2120, 0
        %2127 = vmatpush.msra.mxu0 0.0
        %2128 = vmatpush.msra.mxu0 0.0
        %2129 = vmatpush.msra.mxu0 0.0
        %2130 = vmatpush.msra.mxu0 0.0
        %2131 = vmatpush.msra.mxu0 0.0
        %2132 = vmatpush.msra.mxu0 0.0
        %2133 = vmatpush.msra.mxu0 0.0
        %2134 = vmatpush.msra.mxu0 0.0
        %2135 = vmatpush.msra.mxu0 %v2042
        %2136 = vmatpush.msra.mxu0 %v2040
        %2137 = vmatpush.msra.mxu0 %v2037
        %2138 = vmatpush.msra.mxu0 %v2035
        %2139 = vmatpush.msra.mxu0 %v2032
        %2140 = vmatpush.msra.mxu0 %v2030
        %2141 = vmatpush.msra.mxu0 %v2027
        %2142 = vmatpush.msra.mxu0 %v2025
        %2143 = vmatmul.f32.gmra.mxu0 %v2122
        %v2144 = vpop.f32.mrf.mxu0
        %v2145 = vadd.f32 0.0, %v2144
        %2146 = vmatmul.f32.gmra.mxu0 %v2125
        %v2147 = vpop.f32.mrf.mxu0
        %v2148 = vadd.f32 0.0, %v2147
        %2149 = vdwg.mxu0
        %2150 = vst.msk [vmem:[#allocation2] sm:$0xff] %vm1043, %v2145
        %2151 = vst.msk [vmem:[#allocation2 + $0x8] sm:$0xff] %vm1043, %v2148
        %2152 = vrot.lane.b32.xlu0 %v2044, 96
        %v2153 = vpop.permute.xlu0 %2152
        %2154 = vrot.lane.b32.xlu0 %v2045, 96
        %v2155 = vpop.permute.xlu0 %2154
        %2156 = vrot.lane.b32.xlu0 %v2025, 96
        %v2157 = vpop.permute.xlu0 %2156
        %2158 = vrot.lane.b32.xlu0 %v2027, 96
        %v2159 = vpop.permute.xlu0 %2158
        %2160 = vrot.lane.b32.xlu0 %v2030, 96
        %v2161 = vpop.permute.xlu0 %2160
        %2162 = vrot.lane.b32.xlu0 %v2032, 96
        %v2163 = vpop.permute.xlu0 %2162
        %2164 = vrot.lane.b32.xlu0 %v2035, 96
        %v2165 = vpop.permute.xlu0 %2164
        %2166 = vrot.lane.b32.xlu0 %v2037, 96
        %v2167 = vpop.permute.xlu0 %2166
        %2168 = vrot.lane.b32.xlu0 %v2040, 96
        %v2169 = vpop.permute.xlu0 %2168
        %2170 = vrot.lane.b32.xlu0 %v2042, 96
        %v2171 = vpop.permute.xlu0 %2170
        %v2172 = vsel %vm1043, %v2153, 0
        %v2174 = vsel %vm1043, %v2155, 0
        %v2176 = vsel %vm1043, %v2157, 0
        %v2178 = vsel %vm1043, %v2159, 0
        %v2180 = vsel %vm1043, %v2161, 0
        %v2182 = vsel %vm1043, %v2163, 0
        %v2184 = vsel %vm1043, %v2165, 0
        %v2186 = vsel %vm1043, %v2167, 0
        %v2188 = vsel %vm1043, %v2169, 0
        %v2190 = vsel %vm1043, %v2171, 0
        %2192 = vmatpush.xpose.msra.mxu0 0.0
        %2193 = vmatpush.xpose.msra.mxu0 0.0
        %2194 = vmatpush.xpose.msra.mxu0 0.0
        %2195 = vmatpush.xpose.msra.mxu0 0.0
        %2196 = vmatpush.xpose.msra.mxu0 0.0
        %2197 = vmatpush.xpose.msra.mxu0 0.0
        %2198 = vmatpush.xpose.msra.mxu0 0.0
        %2199 = vmatpush.xpose.msra.mxu0 0.0
        %2200 = vmatpush.xpose.msra.mxu0 %v2190
        %2201 = vmatpush.xpose.msra.mxu0 %v2188
        %2202 = vmatpush.xpose.msra.mxu0 %v2186
        %2203 = vmatpush.xpose.msra.mxu0 %v2184
        %2204 = vmatpush.xpose.msra.mxu0 %v2182
        %2205 = vmatpush.xpose.msra.mxu0 %v2180
        %2206 = vmatpush.xpose.msra.mxu0 %v2178
        %2207 = vmatpush.xpose.msra.mxu0 %v2176
        %2208 = vmatmul.f32.gmra.mxu0 %v2172
        %v2209 = vpop.f32.mrf.mxu0
        %v2210 = vadd.f32 0.0, %v2209
        %2211 = vmatmul.f32.gmra.mxu0 %v2174
        %v2212 = vpop.f32.mrf.mxu0
        %v2213 = vadd.f32 0.0, %v2212
        %2214 = vdwg.mxu0
        %v2215 = vsel %vm1097, %v2210, -inf
        %2216 = vmax.xlane.f32.xlu0 %v2215
        %v2217 = vpop.xlane.xlu0 %2216
        %v2218 = vsel %vm1097, %v2213, -inf
        %2219 = vmax.xlane.f32.xlu0 %v2218
        %v2220 = vpop.xlane.xlu0 %2219
        %v2221 = vsub.f32 %v2210, %v2217
        %v2222 = vsub.f32 %v2213, %v2220
        %v2223 = vmul.f32 %v2221, 1.442695
        %v2224 = vpow.pop %v2223
        %v2225 = vmul.f32 %v2222, 1.442695
        %v2226 = vpow.pop %v2225
        %v2227 = vsel %vm1097, %v2224, 0.0
        %2228 = vadd.xlane.f32.xlu0 %v2227
        %v2229 = vpop.xlane.xlu0 %2228
        %v2230 = vsel %vm1097, %v2226, 0.0
        %2231 = vadd.xlane.f32.xlu0 %v2230
        %v2232 = vpop.xlane.xlu0 %2231
        %v2233 = vrcp.pop %v2229
        %v2234 = vrcp.pop %v2232
        %v2235 = vmul.f32 %v2224, %v2233
        %v2236 = vmul.f32 %v2226, %v2234
        %v2246 = vsel %vm1097, %v2235, 0
        %v2249 = vsel %vm1097, %v2236, 0
        %2251 = vmatpush.msra.mxu0 0.0
        %2252 = vmatpush.msra.mxu0 0.0
        %2253 = vmatpush.msra.mxu0 0.0
        %2254 = vmatpush.msra.mxu0 0.0
        %2255 = vmatpush.msra.mxu0 0.0
        %2256 = vmatpush.msra.mxu0 0.0
        %2257 = vmatpush.msra.mxu0 0.0
        %2258 = vmatpush.msra.mxu0 0.0
        %2259 = vmatpush.msra.mxu0 %v2171
        %2260 = vmatpush.msra.mxu0 %v2169
        %2261 = vmatpush.msra.mxu0 %v2167
        %2262 = vmatpush.msra.mxu0 %v2165
        %2263 = vmatpush.msra.mxu0 %v2163
        %2264 = vmatpush.msra.mxu0 %v2161
        %2265 = vmatpush.msra.mxu0 %v2159
        %2266 = vmatpush.msra.mxu0 %v2157
        %2267 = vmatmul.f32.gmra.mxu0 %v2246
        %v2268 = vpop.f32.mrf.mxu0
        %v2269 = vadd.f32 0.0, %v2268
        %2270 = vmatmul.f32.gmra.mxu0 %v2249
        %v2271 = vpop.f32.mrf.mxu0
        %v2272 = vadd.f32 0.0, %v2271
        %2273 = vdwg.mxu0
        %2276 = vrot.lane.b32.xlu0 %v2269, 32
        %v2277 = vpop.permute.xlu0 %2276
        %2278 = vrot.lane.b32.xlu0 %v2272, 32
        %v2279 = vpop.permute.xlu0 %2278
        %2282 = vst.msk [vmem:[#allocation2] sm:$0xff] %vm1281, %v2277
        %2283 = vst.msk [vmem:[#allocation2 + $0x8] sm:$0xff] %vm1281, %v2279
        %v2284 = vld [vmem:[#allocation2] sm:$0xff]
        %v2285 = vld [vmem:[#allocation2 + $0x8] sm:$0xff]
        %v2286 = vadd.f32 %v2284, %v1632
        %v2287 = vadd.f32 %v2285, %v1635
        %2288 = vmatpush.msra.mxu0 %v527
        %2289 = vmatpush.msra.mxu0 %v526
        %2290 = vmatpush.msra.mxu0 %v525
        %2291 = vmatpush.msra.mxu0 %v524
        %2292 = vmatpush.msra.mxu0 %v523
        %2293 = vmatpush.msra.mxu0 %v522
        %2294 = vmatpush.msra.mxu0 %v521
        %2295 = vmatpush.msra.mxu0 %v520
        %2296 = vmatpush.msra.mxu0 %v519
        %2297 = vmatpush.msra.mxu0 %v518
        %2298 = vmatpush.msra.mxu0 %v517
        %2299 = vmatpush.msra.mxu0 %v516
        %2300 = vmatpush.msra.mxu0 %v515
        %2301 = vmatpush.msra.mxu0 %v514
        %2302 = vmatpush.msra.mxu0 %v513
        %2303 = vmatpush.msra.mxu0 %v512
        %2304 = vmatmul.f32.gmra.mxu0 %v2286
        %v2305 = vpop.f32.mrf.mxu0
        %v2306 = vadd.f32 0.0, %v2305
        %2307 = vmatmul.f32.gmra.mxu0 %v2287
        %v2308 = vpop.f32.mrf.mxu0
        %v2309 = vadd.f32 0.0, %v2308
        %2310 = vdwg.mxu0
        %v2311 = vsub.f32 %v2286, %v2306
        %v2312 = vsub.f32 %v2287, %v2309
        %v2313 = vmul.f32 %v2311, %v2311
        %v2314 = vmul.f32 %v2312, %v2312
        %2315 = vmatpush.msra.mxu0 %v527
        %2316 = vmatpush.msra.mxu0 %v526
        %2317 = vmatpush.msra.mxu0 %v525
        %2318 = vmatpush.msra.mxu0 %v524
        %2319 = vmatpush.msra.mxu0 %v523
        %2320 = vmatpush.msra.mxu0 %v522
        %2321 = vmatpush.msra.mxu0 %v521
        %2322 = vmatpush.msra.mxu0 %v520
        %2323 = vmatpush.msra.mxu0 %v519
        %2324 = vmatpush.msra.mxu0 %v518
        %2325 = vmatpush.msra.mxu0 %v517
        %2326 = vmatpush.msra.mxu0 %v516
        %2327 = vmatpush.msra.mxu0 %v515
        %2328 = vmatpush.msra.mxu0 %v514
        %2329 = vmatpush.msra.mxu0 %v513
        %2330 = vmatpush.msra.mxu0 %v512
        %2331 = vmatmul.f32.gmra.mxu0 %v2313
        %v2332 = vpop.f32.mrf.mxu0
        %v2333 = vadd.f32 1e-05, %v2332
        %2334 = vmatmul.f32.gmra.mxu0 %v2314
        %v2335 = vpop.f32.mrf.mxu0
        %v2336 = vadd.f32 1e-05, %v2335
        %2337 = vdwg.mxu0
        %v2338 = vrsqrt.pop %v2333
        %v2339 = vmul.f32 %v2338, %v2333
        %v2340 = vmul.f32 %v2339, %v2338
        %v2341 = vmul.f32 0.5, %v2340
        %v2342 = vsub.f32 1.5, %v2341
        %v2343 = vmul.f32 %v2338, %v2342
        %vm2344 = vweird.f32 %v2333
        %vm2345 = vweird.f32 %v2338
        %vm2346 = vmor %vm2344, %vm2345
        %v2347 = vsel %vm2346, %v2338, %v2343
        %v2348 = vrsqrt.pop %v2336
        %v2349 = vmul.f32 %v2348, %v2336
        %v2350 = vmul.f32 %v2349, %v2348
        %v2351 = vmul.f32 0.5, %v2350
        %v2352 = vsub.f32 1.5, %v2351
        %v2353 = vmul.f32 %v2348, %v2352
        %vm2354 = vweird.f32 %v2336
        %vm2355 = vweird.f32 %v2348
        %vm2356 = vmor %vm2354, %vm2355
        %v2357 = vsel %vm2356, %v2348, %v2353
        %v2358 = vmul.f32 %v2311, %v2347
        %v2359 = vmul.f32 %v2312, %v2357
        %v2360 = vperm.slane %v1531, 2
        %v2361 = vmul.f32 %v2358, %v2360
        %v2362 = vmul.f32 %v2359, %v2360
        %v2363 = vperm.slane %v1531, 3
        %v2364 = vadd.f32 %v2361, %v2363
        %v2365 = vadd.f32 %v2362, %v2363
        %s2366 = scalar_lea.vmem [#allocation15], 128
        %v2367 = vld [vmem:[%s2366] sm:$0xff]
        %v2368 = vld [vmem:[%s2366 + $0x8] sm:$0xff]
        %v2369 = vld [vmem:[%s2366 + $0x10] sm:$0xff]
        %v2370 = vld [vmem:[%s2366 + $0x18] sm:$0xff]
        %v2371 = vld [vmem:[%s2366 + $0x20] sm:$0xff]
        %v2372 = vld [vmem:[%s2366 + $0x28] sm:$0xff]
        %v2373 = vld [vmem:[%s2366 + $0x30] sm:$0xff]
        %v2374 = vld [vmem:[%s2366 + $0x38] sm:$0xff]
        %v2375 = vld [vmem:[%s2366 + $0x40] sm:$0xff]
        %v2376 = vld [vmem:[%s2366 + $0x48] sm:$0xff]
        %v2377 = vld [vmem:[%s2366 + $0x50] sm:$0xff]
        %v2378 = vld [vmem:[%s2366 + $0x58] sm:$0xff]
        %v2379 = vld [vmem:[%s2366 + $0x60] sm:$0xff]
        %v2380 = vld [vmem:[%s2366 + $0x68] sm:$0xff]
        %v2381 = vld [vmem:[%s2366 + $0x70] sm:$0xff]
        %v2382 = vld [vmem:[%s2366 + $0x78] sm:$0xff]
        %v2383 = vperm.slane %v1531, 4
        %2384 = vmatpush.msra.mxu0 %v2382
        %2385 = vmatpush.msra.mxu0 %v2381
        %2386 = vmatpush.msra.mxu0 %v2380
        %2387 = vmatpush.msra.mxu0 %v2379
        %2388 = vmatpush.msra.mxu0 %v2378
        %2389 = vmatpush.msra.mxu0 %v2377
        %2390 = vmatpush.msra.mxu0 %v2376
        %2391 = vmatpush.msra.mxu0 %v2375
        %2392 = vmatpush.msra.mxu0 %v2374
        %2393 = vmatpush.msra.mxu0 %v2373
        %2394 = vmatpush.msra.mxu0 %v2372
        %2395 = vmatpush.msra.mxu0 %v2371
        %2396 = vmatpush.msra.mxu0 %v2370
        %2397 = vmatpush.msra.mxu0 %v2369
        %2398 = vmatpush.msra.mxu0 %v2368
        %2399 = vmatpush.msra.mxu0 %v2367
        %2400 = vmatmul.f32.gmra.mxu0 %v2364
        %v2401 = vpop.f32.mrf.mxu0
        %v2402 = vadd.f32 %v2383, %v2401
        %2403 = vmatmul.f32.gmra.mxu0 %v2365
        %v2404 = vpop.f32.mrf.mxu0
        %v2405 = vadd.f32 %v2383, %v2404
        %2406 = vdwg.mxu0
        %v2407 = vmax.f32 %v2402, 0.0
        %v2408 = vmax.f32 %v2405, 0.0
        %s2409 = scalar_lea.vmem [#allocation16], 128
        %v2410 = vld [vmem:[%s2409] sm:$0xff]
        %v2411 = vld [vmem:[%s2409 + $0x8] sm:$0xff]
        %v2412 = vld [vmem:[%s2409 + $0x10] sm:$0xff]
        %v2413 = vld [vmem:[%s2409 + $0x18] sm:$0xff]
        %v2414 = vld [vmem:[%s2409 + $0x20] sm:$0xff]
        %v2415 = vld [vmem:[%s2409 + $0x28] sm:$0xff]
        %v2416 = vld [vmem:[%s2409 + $0x30] sm:$0xff]
        %v2417 = vld [vmem:[%s2409 + $0x38] sm:$0xff]
        %v2418 = vld [vmem:[%s2409 + $0x40] sm:$0xff]
        %v2419 = vld [vmem:[%s2409 + $0x48] sm:$0xff]
        %v2420 = vld [vmem:[%s2409 + $0x50] sm:$0xff]
        %v2421 = vld [vmem:[%s2409 + $0x58] sm:$0xff]
        %v2422 = vld [vmem:[%s2409 + $0x60] sm:$0xff]
        %v2423 = vld [vmem:[%s2409 + $0x68] sm:$0xff]
        %v2424 = vld [vmem:[%s2409 + $0x70] sm:$0xff]
        %v2425 = vld [vmem:[%s2409 + $0x78] sm:$0xff]
        %2426 = vmatpush.msra.mxu0 %v2425
        %2427 = vmatpush.msra.mxu0 %v2424
        %2428 = vmatpush.msra.mxu0 %v2423
        %2429 = vmatpush.msra.mxu0 %v2422
        %2430 = vmatpush.msra.mxu0 %v2421
        %2431 = vmatpush.msra.mxu0 %v2420
        %2432 = vmatpush.msra.mxu0 %v2419
        %2433 = vmatpush.msra.mxu0 %v2418
        %2434 = vmatpush.msra.mxu0 %v2417
        %2435 = vmatpush.msra.mxu0 %v2416
        %2436 = vmatpush.msra.mxu0 %v2415
        %2437 = vmatpush.msra.mxu0 %v2414
        %2438 = vmatpush.msra.mxu0 %v2413
        %2439 = vmatpush.msra.mxu0 %v2412
        %2440 = vmatpush.msra.mxu0 %v2411
        %2441 = vmatpush.msra.mxu0 %v2410
        %2442 = vmatmul.f32.gmra.mxu0 %v2407
        %v2443 = vpop.f32.mrf.mxu0
        %v2444 = vadd.f32 0.0, %v2443
        %2445 = vmatmul.f32.gmra.mxu0 %v2408
        %v2446 = vpop.f32.mrf.mxu0
        %v2447 = vadd.f32 0.0, %v2446
        %2448 = vdwg.mxu0
        %v2449 = vadd.f32 %v2364, %v2444
        %v2450 = vadd.f32 %v2365, %v2447
        %v2451 = vperm.slane %v1531, 5
        %v2452 = vadd.f32 %v2449, %v2451
        %v2453 = vadd.f32 %v2450, %v2451
        %2454 = vmatpush.msra.mxu0 %v527
        %2455 = vmatpush.msra.mxu0 %v526
        %2456 = vmatpush.msra.mxu0 %v525
        %2457 = vmatpush.msra.mxu0 %v524
        %2458 = vmatpush.msra.mxu0 %v523
        %2459 = vmatpush.msra.mxu0 %v522
        %2460 = vmatpush.msra.mxu0 %v521
        %2461 = vmatpush.msra.mxu0 %v520
        %2462 = vmatpush.msra.mxu0 %v519
        %2463 = vmatpush.msra.mxu0 %v518
        %2464 = vmatpush.msra.mxu0 %v517
        %2465 = vmatpush.msra.mxu0 %v516
        %2466 = vmatpush.msra.mxu0 %v515
        %2467 = vmatpush.msra.mxu0 %v514
        %2468 = vmatpush.msra.mxu0 %v513
        %2469 = vmatpush.msra.mxu0 %v512
        %2470 = vmatmul.f32.gmra.mxu0 %v2452
        %v2471 = vpop.f32.mrf.mxu0
        %v2472 = vadd.f32 0.0, %v2471
        %2473 = vmatmul.f32.gmra.mxu0 %v2453
        %v2474 = vpop.f32.mrf.mxu0
        %v2475 = vadd.f32 0.0, %v2474
        %2476 = vdwg.mxu0
        %v2477 = vsub.f32 %v2452, %v2472
        %v2478 = vsub.f32 %v2453, %v2475
        %v2479 = vmul.f32 %v2477, %v2477
        %v2480 = vmul.f32 %v2478, %v2478
        %2481 = vmatpush.msra.mxu0 %v527
        %2482 = vmatpush.msra.mxu0 %v526
        %2483 = vmatpush.msra.mxu0 %v525
        %2484 = vmatpush.msra.mxu0 %v524
        %2485 = vmatpush.msra.mxu0 %v523
        %2486 = vmatpush.msra.mxu0 %v522
        %2487 = vmatpush.msra.mxu0 %v521
        %2488 = vmatpush.msra.mxu0 %v520
        %2489 = vmatpush.msra.mxu0 %v519
        %2490 = vmatpush.msra.mxu0 %v518
        %2491 = vmatpush.msra.mxu0 %v517
        %2492 = vmatpush.msra.mxu0 %v516
        %2493 = vmatpush.msra.mxu0 %v515
        %2494 = vmatpush.msra.mxu0 %v514
        %2495 = vmatpush.msra.mxu0 %v513
        %2496 = vmatpush.msra.mxu0 %v512
        %2497 = vmatmul.f32.gmra.mxu0 %v2479
        %v2498 = vpop.f32.mrf.mxu0
        %v2499 = vadd.f32 1e-05, %v2498
        %2500 = vmatmul.f32.gmra.mxu0 %v2480
        %v2501 = vpop.f32.mrf.mxu0
        %v2502 = vadd.f32 1e-05, %v2501
        %2503 = vdwg.mxu0
        %v2504 = vrsqrt.pop %v2499
        %v2505 = vmul.f32 %v2504, %v2499
        %v2506 = vmul.f32 %v2505, %v2504
        %v2507 = vmul.f32 0.5, %v2506
        %v2508 = vsub.f32 1.5, %v2507
        %v2509 = vmul.f32 %v2504, %v2508
        %vm2510 = vweird.f32 %v2499
        %vm2511 = vweird.f32 %v2504
        %vm2512 = vmor %vm2510, %vm2511
        %v2513 = vsel %vm2512, %v2504, %v2509
        %v2514 = vrsqrt.pop %v2502
        %v2515 = vmul.f32 %v2514, %v2502
        %v2516 = vmul.f32 %v2515, %v2514
        %v2517 = vmul.f32 0.5, %v2516
        %v2518 = vsub.f32 1.5, %v2517
        %v2519 = vmul.f32 %v2514, %v2518
        %vm2520 = vweird.f32 %v2502
        %vm2521 = vweird.f32 %v2514
        %vm2522 = vmor %vm2520, %vm2521
        %v2523 = vsel %vm2522, %v2514, %v2519
        %v2524 = vmul.f32 %v2477, %v2513
        %v2525 = vmul.f32 %v2478, %v2523
        %v2526 = vperm.slane %v1531, 6
        %v2527 = vmul.f32 %v2524, %v2526
        %v2528 = vmul.f32 %v2525, %v2526
        %v2529 = vperm.slane %v1531, 7
        %v2530 = vadd.f32 %v2527, %v2529
        %v2531 = vadd.f32 %v2528, %v2529
        %2532 = vst [vmem:[%s509] sm:$0xff] %v2530
        %2533 = vst [vmem:[%s509 + $0x8] sm:$0xff] %v2531
        %s2534 = sand.u32 %s239, 1
        %s2535 = scalar_lea.sflag [#allocation6], %s2534
        %s2536 = sand.u32 %s239, 1
        %s2537 = smul.addr %s2536, 16
        %s2538 = scalar_lea.vmem [#allocation19], %s2537
        // Predicated region
        $region93: #{tpu_custom_call.1} parent=55 // pred_check
          %p2539 = pneg %p249
        $region94: #{tpu_custom_call.1} parent=55 // pred_check_branch
          %2541 = sbr.rel (%p2539) target = $region96
        $region95: #{tpu_custom_call.1} parent=55 // pred_region
          %s2542 = smul.u32 2, %s32
          %2544 = vsyncadd %s2535, 0
          %s2545 = smul.addr %s2542, 8
          %s2546 = scalar_lea.hbm %s9, %s2545
          %s2547 = sshll.u32 %s2538, 4
          %s2548 = int_to_ptr.vmem [resolvable:$true] %s2547
          %s2549 = sshll.u32 %s2546, 4
          %s2550 = int_to_ptr.hbm [resolvable:$true] %s2549
          %2555 = dma.vmem_to_hbm [thread:$0]  %s2548, 256, %s2550, %s2535, 128, 128, 8
        $region96: #{tpu_custom_call.1} parent=55 // pred_fallthru
          _
      $region56: #{tpu_custom_call.1} parent=5 // pred_fallthru
        _
      %p2556 = scmp.le.s32.totalorder 2, %s27
      // Predicated region
      $region97: #{tpu_custom_call.1} parent=5 // pred_check
        %p2557 = pneg %p2556
      $region98: #{tpu_custom_call.1} parent=5 // pred_check_branch
        %2559 = sbr.rel (%p2557) target = $region100
      $region99: #{tpu_custom_call.1} parent=5 // pred_region
        %s2560 = ssub.s32 %s27, 2
        // Predicated region
        $region101: #{tpu_custom_call.1} parent=99 // pred_check
          %p2561 = pneg %p255
        $region102: #{tpu_custom_call.1} parent=99 // pred_check_branch
          %2563 = sbr.rel (%p2561) target = $region104
        $region103: #{tpu_custom_call.1} parent=99 // pred_region
          %s2564 = sand.u32 %s240, 1
          %s2565 = scalar_lea.sflag [#allocation6], %s2564
          %s2566 = sand.u32 %s240, 1
          %s2567 = smul.addr %s2566, 16
          %s2568 = scalar_lea.vmem [#allocation19], %s2567
          %2570 = dma.done %s2565, 256
        $region104: #{tpu_custom_call.1} parent=99 // pred_fallthru
          _
      $region100: #{tpu_custom_call.1} parent=5 // pred_fallthru
        _
    $region6: #{tpu_custom_call.1} parent=1 // loop_footer
      %s31 = sadd.s32 1, %s27
    $region7: #{tpu_custom_call.1} parent=1 // loop_footer_branch
      %26 = sbr.rel target = $region3
    $region8: #{tpu_custom_call.1} parent=1 // loop_exit
      _
    %2571 = vsyncpa [#allocation5], 1
    %s2572 = scalar_lea.sflag [#allocation5], 1
    %2573 = vsyncpa %s2572, 1
    %2574 = vsyncpa [#allocation8], 1
    %s2575 = scalar_lea.sflag [#allocation8], 1
    %2576 = vsyncpa %s2575, 1
    %2577 = vsyncpa [#allocation11], 1
    %2578 = vsyncpa [#allocation14], 1
    %2579 = vsyncpa [#allocation17], 1
    %2580 = vsyncpa [#allocation6], 1
    %s2581 = scalar_lea.sflag [#allocation6], 1
    %2582 = vsyncpa %s2581, 1

</llo_original>
